<compile_context>
chip_gen: v7x
topology: tpu7x:2x2x1
jax: 0.10.0
libtpu: 0.0.40
codegen_flags: <defaults>
</compile_context>

<pallas_src>
import numpy as np
import jax
import jax.numpy as jnp
from jax.experimental import pallas as pl
from jax.experimental.pallas import tpu as pltpu


def _round_up(x, m):
    return ((x + m - 1) // m) * m


def _pick_tile(n):
    # Node-dim tile: big enough to amortize per-grid-step overhead (~0.35 us),
    # small enough that double-buffered bf16 A tiles (2 * t*t*2 B) stay far
    # inside the 32 MiB scoped-VMEM budget on v5e/v6e/v7x.
    for t in (128, 256, 512):
        if n <= t:
            return t
    return 512


# ---------------- kernel 1: h1 = ReLU((A @ x) * w1 + b1); M = h1 @ W2 ---------
def conv1_kernel(a_ref, x_ref, w1_ref, b1_ref, w2_ref, m_ref, acc_ref):
    k = pl.program_id(1)

    @pl.when(k == 0)
    def _():
        acc_ref[...] = jnp.zeros_like(acc_ref)

    # Accumulate A @ x (in_features == 1; x padded to 8 lanes, col 0 is real).
    acc_ref[...] += jnp.dot(a_ref[...], x_ref[...],
                            preferred_element_type=jnp.float32)

    @pl.when(k == pl.num_programs(1) - 1)
    def _():
        ax = acc_ref[:, :1]                                          # [TM, 1] f32
        h1 = jnp.maximum(ax * w1_ref[...] + b1_ref[...], 0.0)        # [TM, Hp] f32
        m = jnp.dot(h1.astype(jnp.bfloat16), w2_ref[...],
                    preferred_element_type=jnp.float32)              # [TM, Hp] f32
        m_ref[...] = m.astype(m_ref.dtype)


# ---------------- kernel 2: H2 = ReLU(A @ M + b2) -----------------------------
def conv2_kernel(a_ref, m_ref, b2_ref, h2_ref, acc_ref):
    k = pl.program_id(1)

    @pl.when(k == 0)
    def _():
        acc_ref[...] = jnp.zeros_like(acc_ref)

    acc_ref[...] += jnp.dot(a_ref[...], m_ref[...],
                            preferred_element_type=jnp.float32)

    @pl.when(k == pl.num_programs(1) - 1)
    def _():
        h2_ref[...] = jnp.maximum(acc_ref[...] + b2_ref[...], 0.0).astype(h2_ref.dtype)


# ---------------- kernel 3: out = fc2(ReLU(fc1(P @ H2))) ----------------------
def pool_fc_kernel(p_ref, h2_ref, wf1_ref, bf1_ref, wf2_ref, bf2_ref, o_ref, acc_ref):
    k = pl.program_id(0)

    @pl.when(k == 0)
    def _():
        acc_ref[...] = jnp.zeros_like(acc_ref)

    acc_ref[...] += jnp.dot(p_ref[...], h2_ref[...],
                            preferred_element_type=jnp.float32)

    @pl.when(k == pl.num_programs(0) - 1)
    def _():
        g = acc_ref[...]                                             # [Gp, Hp] f32
        z = jnp.maximum(
            jnp.dot(g, wf1_ref[...], preferred_element_type=jnp.float32)
            + bf1_ref[...], 0.0)                                     # [Gp, F1p]
        o_ref[...] = (jnp.dot(z, wf2_ref[...], preferred_element_type=jnp.float32)
                      + bf2_ref[...]).astype(o_ref.dtype)            # [Gp, F2p]


# ---------------- wrapper -----------------------------------------------------
def gnn_forward(a_norm, x, pool, params):
    w1, b1, w2, b2, wf1, bf1, wf2, bf2 = params
    N = a_norm.shape[0]
    G = pool.shape[0]
    H = w1.shape[1]
    F1 = wf1.shape[1]

    f32, bf16 = jnp.float32, jnp.bfloat16

    HP = _round_up(max(H, 128), 128)      # hidden 64 -> lane-dense 128
    F1P = _round_up(max(F1, 128), 128)    # fc1 width 32 -> lane-dense 128
    F2P = 128                             # lane-dense padded output slab
    GP = _round_up(max(G, 8), 8)          # graphs padded to sublane multiple
    TILE = _pick_tile(N)
    TM = TK = TILE
    NP = _round_up(N, TILE)
    XW = 8                                # x padded to 8 lanes (rank-1 hoist)

    # Zero-pad everything to aligned shapes; bf16 for the MXU-streamed operands.
    # (Padded A rows/cols are zero, so padded nodes never leak into real rows,
    #  and the pool matrix zeroes them out of the graph readout.)
    a_p = jnp.zeros((NP, NP), f32).at[:N, :N].set(a_norm).astype(bf16)
    x_p = jnp.zeros((NP, XW), f32).at[:N, :1].set(x).astype(bf16)
    p_p = jnp.zeros((GP, NP), f32).at[:G, :N].set(pool).astype(bf16)

    w1_p = jnp.zeros((1, HP), f32).at[:, :H].set(w1)
    b1_p = jnp.zeros((1, HP), f32).at[:, :H].set(b1)
    w2_p = jnp.zeros((HP, HP), f32).at[:H, :H].set(w2).astype(bf16)
    b2_p = jnp.zeros((1, HP), f32).at[:, :H].set(b2)
    wf1_p = jnp.zeros((HP, F1P), f32).at[:H, :F1].set(wf1)
    bf1_p = jnp.zeros((1, F1P), f32).at[:, :F1].set(bf1)
    wf2_p = jnp.zeros((F1P, F2P), f32).at[:F1, :1].set(wf2)
    bf2_p = jnp.zeros((1, F2P), f32).at[:, :1].set(bf2)

    grid2d = (NP // TM, NP // TK)
    cparams = pltpu.CompilerParams(
        dimension_semantics=("parallel", "arbitrary"),
        vmem_limit_bytes=32 * 1024 * 1024,
    )
    const2 = lambda i, k: (0, 0)

    # --- conv1 (+ fused h1 @ W2), tiled over (row-block, K-block) -------------
    m = pl.pallas_call(
        conv1_kernel,
        out_shape=jax.ShapeDtypeStruct((NP, HP), bf16),
        grid_spec=pltpu.PrefetchScalarGridSpec(
            num_scalar_prefetch=0,
            grid=grid2d,
            in_specs=[
                pl.BlockSpec((TM, TK), lambda i, k: (i, k)),   # A tile (bf16)
                pl.BlockSpec((TK, XW), lambda i, k: (k, 0)),   # x tile
                pl.BlockSpec((1, HP), const2),                 # w1 (resident)
                pl.BlockSpec((1, HP), const2),                 # b1 (resident)
                pl.BlockSpec((HP, HP), const2),                # W2 (resident)
            ],
            out_specs=pl.BlockSpec((TM, HP), lambda i, k: (i, 0)),
            scratch_shapes=[pltpu.VMEM((TM, XW), jnp.float32)],
        ),
        compiler_params=cparams,
        cost_estimate=pl.CostEstimate(
            flops=2 * NP * NP * XW + 2 * NP * HP * HP,
            transcendentals=0,
            bytes_accessed=2 * NP * NP + 2 * NP * XW + 2 * NP * HP + 2 * HP * HP,
        ),
    )(a_p, x_p, w1_p, b1_p, w2_p)

    # --- conv2, tiled over (row-block, K-block) -------------------------------
    h2 = pl.pallas_call(
        conv2_kernel,
        out_shape=jax.ShapeDtypeStruct((NP, HP), bf16),
        grid_spec=pltpu.PrefetchScalarGridSpec(
            num_scalar_prefetch=0,
            grid=grid2d,
            in_specs=[
                pl.BlockSpec((TM, TK), lambda i, k: (i, k)),   # A tile (bf16)
                pl.BlockSpec((TK, HP), lambda i, k: (k, 0)),   # M tile (bf16)
                pl.BlockSpec((1, HP), const2),                 # b2 (resident)
            ],
            out_specs=pl.BlockSpec((TM, HP), lambda i, k: (i, 0)),
            scratch_shapes=[pltpu.VMEM((TM, HP), jnp.float32)],
        ),
        compiler_params=cparams,
        cost_estimate=pl.CostEstimate(
            flops=2 * NP * NP * HP,
            transcendentals=0,
            bytes_accessed=2 * NP * NP + 4 * NP * HP,
        ),
    )(a_p, m, b2_p)

    # --- pooled epilogue: reduce over node tiles, lane-dense [GP, 128] output -
    out = pl.pallas_call(
        pool_fc_kernel,
        out_shape=jax.ShapeDtypeStruct((GP, F2P), f32),
        grid_spec=pltpu.PrefetchScalarGridSpec(
            num_scalar_prefetch=0,
            grid=(NP // TK,),
            in_specs=[
                pl.BlockSpec((GP, TK), lambda k: (0, k)),      # pool tile (bf16)
                pl.BlockSpec((TK, HP), lambda k: (k, 0)),      # H2 tile (bf16)
                pl.BlockSpec((HP, F1P), lambda k: (0, 0)),     # Wf1 (resident)
                pl.BlockSpec((1, F1P), lambda k: (0, 0)),      # bf1
                pl.BlockSpec((F1P, F2P), lambda k: (0, 0)),    # Wf2
                pl.BlockSpec((1, F2P), lambda k: (0, 0)),      # bf2
            ],
            out_specs=pl.BlockSpec((GP, F2P), lambda k: (0, 0)),
            scratch_shapes=[pltpu.VMEM((GP, HP), jnp.float32)],
        ),
        compiler_params=pltpu.CompilerParams(
            dimension_semantics=("arbitrary",),
            vmem_limit_bytes=32 * 1024 * 1024,
        ),
        cost_estimate=pl.CostEstimate(
            flops=2 * GP * NP * HP + 2 * GP * HP * F1P + 2 * GP * F1P * F2P,
            transcendentals=0,
            bytes_accessed=2 * GP * NP + 2 * NP * HP + 4 * GP * F2P,
        ),
    )(p_p, h2, wf1_p, bf1_p, wf2_p, bf2_p)

    return out[:G, 0]                     # matches x.view(-1) in the PyTorch module


# ---------------- host-side graph glue ----------------------------------------
def build_gcn_adjacency(edge_index, num_nodes):
    """Dense GCN-normalized adjacency D^-1/2 (A + I) D^-1/2."""
    a = np.zeros((num_nodes, num_nodes), dtype=np.float32)
    src, dst = edge_index
    np.add.at(a, (dst, src), 1.0)                 # messages flow src -> dst
    a = a + np.eye(num_nodes, dtype=np.float32)   # self loops
    deg = a.sum(axis=1)
    d_inv_sqrt = 1.0 / np.sqrt(np.maximum(deg, 1e-12))
    return (d_inv_sqrt[:, None] * a * d_inv_sqrt[None, :]).astype(np.float32)


def build_pool_matrix(batch, num_graphs):
    n = batch.shape[0]
    p = np.zeros((num_graphs, n), dtype=np.float32)
    for g in range(num_graphs):
        idx = np.where(batch == g)[0]
        if len(idx) > 0:                          # guard empty graphs
            p[g, idx] = 1.0 / len(idx)
    return p


def gnn_reference(a, x, pool, params):
    """Pure-JAX f32 reference matching the PyTorch GNNModel forward."""
    w1, b1, w2, b2, wf1, bf1, wf2, bf2 = params
    h = jnp.maximum(a @ (x @ w1) + b1, 0.0)
    h = jnp.maximum(a @ (h @ w2) + b2, 0.0)
    g = pool @ h
    z = jnp.maximum(g @ wf1 + bf1, 0.0)
    return (z @ wf2 + bf2).reshape(-1)


if __name__ == "__main__":
    # Small synthetic graph batch: 2 graphs x 8 nodes, 1 input feature per node.
    N_PER_GRAPH, NUM_GRAPHS = 8, 2
    N = N_PER_GRAPH * NUM_GRAPHS
    HIDDEN = 64                                   # GNNModel default hidden_dim

    # Bidirectional ring graphs within each graph of the batch.
    srcs, dsts = [], []
    for g in range(NUM_GRAPHS):
        base = g * N_PER_GRAPH
        for i in range(N_PER_GRAPH):
            j = (i + 1) % N_PER_GRAPH
            srcs += [base + i, base + j]
            dsts += [base + j, base + i]
    edge_index = np.stack([np.array(srcs), np.array(dsts)])   # [2, E]
    batch = np.repeat(np.arange(NUM_GRAPHS), N_PER_GRAPH)     # [N]

    a_norm = jnp.asarray(build_gcn_adjacency(edge_index, N))
    pool = jnp.asarray(build_pool_matrix(batch, NUM_GRAPHS))

    key = jax.random.PRNGKey(0)
    keys = jax.random.split(key, 9)
    x = jax.random.normal(keys[0], (N, 1), dtype=jnp.float32)  # data.x
    # TODO(synk): data.edge_attr is unused by GNNModel.forward, so it is omitted.

    w1 = jax.random.normal(keys[1], (1, HIDDEN), dtype=jnp.float32) * 0.1
    b1 = jax.random.normal(keys[2], (1, HIDDEN), dtype=jnp.float32) * 0.1
    w2 = jax.random.normal(keys[3], (HIDDEN, HIDDEN), dtype=jnp.float32) * 0.1
    b2 = jax.random.normal(keys[4], (1, HIDDEN), dtype=jnp.float32) * 0.1
    wf1 = jax.random.normal(keys[5], (HIDDEN, 32), dtype=jnp.float32) * 0.1
    bf1 = jax.random.normal(keys[6], (1, 32), dtype=jnp.float32) * 0.1
    wf2 = jax.random.normal(keys[7], (32, 1), dtype=jnp.float32) * 0.1
    bf2 = jax.random.normal(keys[8], (1, 1), dtype=jnp.float32) * 0.1
    params = (w1, b1, w2, b2, wf1, bf1, wf2, bf2)

    out = jax.jit(gnn_forward)(a_norm, x, pool, params)
    jax.block_until_ready(out)
    assert out.shape == (NUM_GRAPHS,)

    ref = gnn_reference(a_norm, x, pool, params)
    np.testing.assert_allclose(np.asarray(out), np.asarray(ref), rtol=5e-2, atol=5e-2)
    print("KERNEL_OK")
</pallas_src>

<mosaic_0001>
module attributes {stable_mosaic.version = 11 : i64} {
  func.func @conv2_kernel(%arg0: i32, %arg1: i32, %arg2: memref<128x128xbf16, #tpu.memory_space<vmem>>, %arg3: memref<128x128xbf16, #tpu.memory_space<vmem>>, %arg4: memref<1x128xf32, #tpu.memory_space<vmem>>, %arg5: memref<128x128xbf16, #tpu.memory_space<vmem>>, %arg6: memref<128x128xf32, #tpu.memory_space<vmem>>) attributes {dimension_semantics = [#tpu.dimension_semantics<parallel>, #tpu.dimension_semantics<arbitrary>], iteration_bounds = array<i64: 1, 1>, scalar_prefetch = 0 : i64, scratch_operands = 1 : i64, tpu.core_type = #tpu.core_type<tc>, window_params = [{transform_indices = @transform_0, window_bounds = array<i64: 128, 128>}, {transform_indices = @transform_1, window_bounds = array<i64: 128, 128>}, {pipeline_mode = #tpu.pipeline_mode<synchronous>, transform_indices = @transform_2, window_bounds = array<i64: 1, 128>}, {transform_indices = @transform_3, window_bounds = array<i64: 128, 128>}]} {
    %c0_i32 = arith.constant 0 : i32
    %0 = arith.cmpi eq, %arg1, %c0_i32 : i32
    %1 = arith.extui %0 : i1 to i32
    %c0_i32_0 = arith.constant 0 : i32
    %2 = arith.cmpi ne, %1, %c0_i32_0 : i32
    scf.if %2 {
      %cst_10 = arith.constant 0.000000e+00 : f32
      %12 = vector.broadcast %cst_10 : f32 to vector<128x128xf32>
      %c0_11 = arith.constant 0 : index
      %c0_12 = arith.constant 0 : index
      %13 = vector.load %arg6[%c0_11, %c0_12] : memref<128x128xf32, #tpu.memory_space<vmem>>, vector<128x128xf32>
      tpu.vector_store %arg6[%c0_11, %c0_12], %12 {strides = array<i32>} : memref<128x128xf32, #tpu.memory_space<vmem>>, vector<128x128xf32>,
    } else {
    }
    %c0 = arith.constant 0 : index
    %c0_1 = arith.constant 0 : index
    %3 = vector.load %arg6[%c0, %c0_1] : memref<128x128xf32, #tpu.memory_space<vmem>>, vector<128x128xf32>
    %c0_2 = arith.constant 0 : index
    %c0_3 = arith.constant 0 : index
    %4 = vector.load %arg2[%c0_2, %c0_3] : memref<128x128xbf16, #tpu.memory_space<vmem>>, vector<128x128xbf16>
    %c0_4 = arith.constant 0 : index
    %c0_5 = arith.constant 0 : index
    %5 = vector.load %arg3[%c0_4, %c0_5] : memref<128x128xbf16, #tpu.memory_space<vmem>>, vector<128x128xbf16>
    %cst = arith.constant dense<0.000000e+00> : vector<128x128xf32>
    %6 = tpu.matmul %4, %5, %cst {dimension_numbers = #tpu.dot_dimension_numbers<[1], [0], [0], [1], [0, 0, 1, 1], [], []>} : vector<128x128xbf16>, vector<128x128xbf16>, vector<128x128xf32> -> vector<128x128xf32>
    %7 = arith.addf %3, %6 : vector<128x128xf32>
    %c0_6 = arith.constant 0 : index
    %c0_7 = arith.constant 0 : index
    %8 = vector.load %arg6[%c0_6, %c0_7] : memref<128x128xf32, #tpu.memory_space<vmem>>, vector<128x128xf32>
    tpu.vector_store %arg6[%c0_6, %c0_7], %7 {strides = array<i32>} : memref<128x128xf32, #tpu.memory_space<vmem>>, vector<128x128xf32>,
    %c0_i32_8 = arith.constant 0 : i32
    %9 = arith.cmpi eq, %arg1, %c0_i32_8 : i32
    %10 = arith.extui %9 : i1 to i32
    %c0_i32_9 = arith.constant 0 : i32
    %11 = arith.cmpi ne, %10, %c0_i32_9 : i32
    scf.if %11 {
      %c0_10 = arith.constant 0 : index
      %c0_11 = arith.constant 0 : index
      %12 = vector.load %arg6[%c0_10, %c0_11] : memref<128x128xf32, #tpu.memory_space<vmem>>, vector<128x128xf32>
      %c0_12 = arith.constant 0 : index
      %c0_13 = arith.constant 0 : index
      %13 = vector.load %arg4[%c0_12, %c0_13] : memref<1x128xf32, #tpu.memory_space<vmem>>, vector<1x128xf32>
      %14 = vector.broadcast %13 : vector<1x128xf32> to vector<128x128xf32>
      %15 = arith.addf %12, %14 : vector<128x128xf32>
      %cst_14 = arith.constant 0.000000e+00 : f32
      %16 = vector.broadcast %cst_14 : f32 to vector<128x128xf32>
      %17 = arith.maximumf %15, %16 : vector<128x128xf32>
      %18 = arith.truncf %17 : vector<128x128xf32> to vector<128x128xbf16>
      %c0_15 = arith.constant 0 : index
      %c0_16 = arith.constant 0 : index
      %19 = vector.load %arg5[%c0_15, %c0_16] : memref<128x128xbf16, #tpu.memory_space<vmem>>, vector<128x128xbf16>
      tpu.vector_store %arg5[%c0_15, %c0_16], %18 {strides = array<i32>} : memref<128x128xbf16, #tpu.memory_space<vmem>>, vector<128x128xbf16>,
    } else {
    }
    return
  }
  func.func @transform_0(%arg0: i32, %arg1: i32) -> (i32, i32) {
    %c0_i32 = arith.constant 0 : i32
    return %arg0, %arg1 : i32, i32
  }
  func.func @transform_1(%arg0: i32, %arg1: i32) -> (i32, i32) {
    %c0_i32 = arith.constant 0 : i32
    %c0_i32_0 = arith.constant 0 : i32
    return %arg1, %c0_i32 : i32, i32
  }
  func.func @transform_2(%arg0: i32, %arg1: i32) -> (i32, i32) {
    %c0_i32 = arith.constant 0 : i32
    %c0_i32_0 = arith.constant 0 : i32
    %c0_i32_1 = arith.constant 0 : i32
    return %c0_i32, %c0_i32_0 : i32, i32
  }
  func.func @transform_3(%arg0: i32, %arg1: i32) -> (i32, i32) {
    %c0_i32 = arith.constant 0 : i32
    %c0_i32_0 = arith.constant 0 : i32
    return %arg0, %c0_i32 : i32, i32
  }
}

module attributes {stable_mosaic.version = 11 : i64} {
  func.func @conv1_kernel(%arg0: i32, %arg1: i32, %arg2: memref<128x128xbf16, #tpu.memory_space<vmem>>, %arg3: memref<128x8xbf16, #tpu.memory_space<vmem>>, %arg4: memref<1x128xf32, #tpu.memory_space<vmem>>, %arg5: memref<1x128xf32, #tpu.memory_space<vmem>>, %arg6: memref<128x128xbf16, #tpu.memory_space<vmem>>, %arg7: memref<128x128xbf16, #tpu.memory_space<vmem>>, %arg8: memref<128x8xf32, #tpu.memory_space<vmem>>) attributes {dimension_semantics = [#tpu.dimension_semantics<parallel>, #tpu.dimension_semantics<arbitrary>], iteration_bounds = array<i64: 1, 1>, scalar_prefetch = 0 : i64, scratch_operands = 1 : i64, tpu.core_type = #tpu.core_type<tc>, window_params = [{transform_indices = @transform_0, window_bounds = array<i64: 128, 128>}, {transform_indices = @transform_1, window_bounds = array<i64: 128, 8>}, {pipeline_mode = #tpu.pipeline_mode<synchronous>, transform_indices = @transform_2, window_bounds = array<i64: 1, 128>}, {pipeline_mode = #tpu.pipeline_mode<synchronous>, transform_indices = @transform_3, window_bounds = array<i64: 1, 128>}, {pipeline_mode = #tpu.pipeline_mode<synchronous>, transform_indices = @transform_4, window_bounds = array<i64: 128, 128>}, {transform_indices = @transform_5, window_bounds = array<i64: 128, 128>}]} {
    %c0_i32 = arith.constant 0 : i32
    %0 = arith.cmpi eq, %arg1, %c0_i32 : i32
    %1 = arith.extui %0 : i1 to i32
    %c0_i32_0 = arith.constant 0 : i32
    %2 = arith.cmpi ne, %1, %c0_i32_0 : i32
    scf.if %2 {
      %cst_10 = arith.constant 0.000000e+00 : f32
      %12 = vector.broadcast %cst_10 : f32 to vector<128x8xf32>
      %c0_11 = arith.constant 0 : index
      %c0_12 = arith.constant 0 : index
      %13 = vector.load %arg8[%c0_11, %c0_12] : memref<128x8xf32, #tpu.memory_space<vmem>>, vector<128x8xf32>
      tpu.vector_store %arg8[%c0_11, %c0_12], %12 {strides = array<i32>} : memref<128x8xf32, #tpu.memory_space<vmem>>, vector<128x8xf32>,
    } else {
    }
    %c0 = arith.constant 0 : index
    %c0_1 = arith.constant 0 : index
    %3 = vector.load %arg8[%c0, %c0_1] : memref<128x8xf32, #tpu.memory_space<vmem>>, vector<128x8xf32>
    %c0_2 = arith.constant 0 : index
    %c0_3 = arith.constant 0 : index
    %4 = vector.load %arg2[%c0_2, %c0_3] : memref<128x128xbf16, #tpu.memory_space<vmem>>, vector<128x128xbf16>
    %c0_4 = arith.constant 0 : index
    %c0_5 = arith.constant 0 : index
    %5 = vector.load %arg3[%c0_4, %c0_5] : memref<128x8xbf16, #tpu.memory_space<vmem>>, vector<128x8xbf16>
    %cst = arith.constant dense<0.000000e+00> : vector<128x8xf32>
    %6 = tpu.matmul %4, %5, %cst {dimension_numbers = #tpu.dot_dimension_numbers<[1], [0], [0], [1], [0, 0, 1, 1], [], []>} : vector<128x128xbf16>, vector<128x8xbf16>, vector<128x8xf32> -> vector<128x8xf32>
    %7 = arith.addf %3, %6 : vector<128x8xf32>
    %c0_6 = arith.constant 0 : index
    %c0_7 = arith.constant 0 : index
    %8 = vector.load %arg8[%c0_6, %c0_7] : memref<128x8xf32, #tpu.memory_space<vmem>>, vector<128x8xf32>
    tpu.vector_store %arg8[%c0_6, %c0_7], %7 {strides = array<i32>} : memref<128x8xf32, #tpu.memory_space<vmem>>, vector<128x8xf32>,
    %c0_i32_8 = arith.constant 0 : i32
    %9 = arith.cmpi eq, %arg1, %c0_i32_8 : i32
    %10 = arith.extui %9 : i1 to i32
    %c0_i32_9 = arith.constant 0 : i32
    %11 = arith.cmpi ne, %10, %c0_i32_9 : i32
    scf.if %11 {
      %c0_10 = arith.constant 0 : index
      %c0_11 = arith.constant 0 : index
      %12 = vector.load %arg8[%c0_10, %c0_11] : memref<128x8xf32, #tpu.memory_space<vmem>>, vector<128x1xf32>
      %c0_12 = arith.constant 0 : index
      %c0_13 = arith.constant 0 : index
      %13 = vector.load %arg4[%c0_12, %c0_13] : memref<1x128xf32, #tpu.memory_space<vmem>>, vector<1x128xf32>
      %14 = vector.broadcast %12 : vector<128x1xf32> to vector<128x128xf32>
      %15 = vector.broadcast %13 : vector<1x128xf32> to vector<128x128xf32>
      %16 = arith.mulf %14, %15 : vector<128x128xf32>
      %c0_14 = arith.constant 0 : index
      %c0_15 = arith.constant 0 : index
      %17 = vector.load %arg5[%c0_14, %c0_15] : memref<1x128xf32, #tpu.memory_space<vmem>>, vector<1x128xf32>
      %18 = vector.broadcast %17 : vector<1x128xf32> to vector<128x128xf32>
      %19 = arith.addf %16, %18 : vector<128x128xf32>
      %cst_16 = arith.constant 0.000000e+00 : f32
      %20 = vector.broadcast %cst_16 : f32 to vector<128x128xf32>
      %21 = arith.maximumf %19, %20 : vector<128x128xf32>
      %22 = arith.truncf %21 : vector<128x128xf32> to vector<128x128xbf16>
      %c0_17 = arith.constant 0 : index
      %c0_18 = arith.constant 0 : index
      %23 = vector.load %arg6[%c0_17, %c0_18] : memref<128x128xbf16, #tpu.memory_space<vmem>>, vector<128x128xbf16>
      %cst_19 = arith.constant dense<0.000000e+00> : vector<128x128xf32>
      %24 = tpu.matmul %22, %23, %cst_19 {dimension_numbers = #tpu.dot_dimension_numbers<[1], [0], [0], [1], [0, 0, 1, 1], [], []>} : vector<128x128xbf16>, vector<128x128xbf16>, vector<128x128xf32> -> vector<128x128xf32>
      %25 = arith.truncf %24 : vector<128x128xf32> to vector<128x128xbf16>
      %c0_20 = arith.constant 0 : index
      %c0_21 = arith.constant 0 : index
      %26 = vector.load %arg7[%c0_20, %c0_21] : memref<128x128xbf16, #tpu.memory_space<vmem>>, vector<128x128xbf16>
      tpu.vector_store %arg7[%c0_20, %c0_21], %25 {strides = array<i32>} : memref<128x128xbf16, #tpu.memory_space<vmem>>, vector<128x128xbf16>,
    } else {
    }
    return
  }
  func.func @transform_0(%arg0: i32, %arg1: i32) -> (i32, i32) {
    %c0_i32 = arith.constant 0 : i32
    return %arg0, %arg1 : i32, i32
  }
  func.func @transform_1(%arg0: i32, %arg1: i32) -> (i32, i32) {
    %c0_i32 = arith.constant 0 : i32
    %c0_i32_0 = arith.constant 0 : i32
    return %arg1, %c0_i32 : i32, i32
  }
  func.func @transform_2(%arg0: i32, %arg1: i32) -> (i32, i32) {
    %c0_i32 = arith.constant 0 : i32
    %c0_i32_0 = arith.constant 0 : i32
    %c0_i32_1 = arith.constant 0 : i32
    return %c0_i32, %c0_i32_0 : i32, i32
  }
  func.func @transform_3(%arg0: i32, %arg1: i32) -> (i32, i32) {
    %c0_i32 = arith.constant 0 : i32
    %c0_i32_0 = arith.constant 0 : i32
    %c0_i32_1 = arith.constant 0 : i32
    return %c0_i32, %c0_i32_0 : i32, i32
  }
  func.func @transform_4(%arg0: i32, %arg1: i32) -> (i32, i32) {
    %c0_i32 = arith.constant 0 : i32
    %c0_i32_0 = arith.constant 0 : i32
    %c0_i32_1 = arith.constant 0 : i32
    return %c0_i32, %c0_i32_0 : i32, i32
  }
  func.func @transform_5(%arg0: i32, %arg1: i32) -> (i32, i32) {
    %c0_i32 = arith.constant 0 : i32
    %c0_i32_0 = arith.constant 0 : i32
    return %arg0, %c0_i32 : i32, i32
  }
}

module attributes {stable_mosaic.version = 11 : i64} {
  func.func @pool_fc_kernel(%arg0: i32, %arg1: memref<8x128xbf16, #tpu.memory_space<vmem>>, %arg2: memref<128x128xbf16, #tpu.memory_space<vmem>>, %arg3: memref<128x128xf32, #tpu.memory_space<vmem>>, %arg4: memref<1x128xf32, #tpu.memory_space<vmem>>, %arg5: memref<128x128xf32, #tpu.memory_space<vmem>>, %arg6: memref<1x128xf32, #tpu.memory_space<vmem>>, %arg7: memref<8x128xf32, #tpu.memory_space<vmem>>, %arg8: memref<8x128xf32, #tpu.memory_space<vmem>>) attributes {dimension_semantics = [#tpu.dimension_semantics<arbitrary>], iteration_bounds = array<i64: 1>, scalar_prefetch = 0 : i64, scratch_operands = 1 : i64, tpu.core_type = #tpu.core_type<tc>, window_params = [{transform_indices = @transform_0, window_bounds = array<i64: 8, 128>}, {transform_indices = @transform_1, window_bounds = array<i64: 128, 128>}, {pipeline_mode = #tpu.pipeline_mode<synchronous>, transform_indices = @transform_2, window_bounds = array<i64: 128, 128>}, {pipeline_mode = #tpu.pipeline_mode<synchronous>, transform_indices = @transform_3, window_bounds = array<i64: 1, 128>}, {pipeline_mode = #tpu.pipeline_mode<synchronous>, transform_indices = @transform_4, window_bounds = array<i64: 128, 128>}, {pipeline_mode = #tpu.pipeline_mode<synchronous>, transform_indices = @transform_5, window_bounds = array<i64: 1, 128>}, {pipeline_mode = #tpu.pipeline_mode<synchronous>, transform_indices = @transform_6, window_bounds = array<i64: 8, 128>}]} {
    %c0_i32 = arith.constant 0 : i32
    %0 = arith.cmpi eq, %arg0, %c0_i32 : i32
    %1 = arith.extui %0 : i1 to i32
    %c0_i32_0 = arith.constant 0 : i32
    %2 = arith.cmpi ne, %1, %c0_i32_0 : i32
    scf.if %2 {
      %cst_10 = arith.constant 0.000000e+00 : f32
      %12 = vector.broadcast %cst_10 : f32 to vector<8x128xf32>
      %c0_11 = arith.constant 0 : index
      %c0_12 = arith.constant 0 : index
      %13 = vector.load %arg8[%c0_11, %c0_12] : memref<8x128xf32, #tpu.memory_space<vmem>>, vector<8x128xf32>
      tpu.vector_store %arg8[%c0_11, %c0_12], %12 {strides = array<i32>} : memref<8x128xf32, #tpu.memory_space<vmem>>, vector<8x128xf32>,
    } else {
    }
    %c0 = arith.constant 0 : index
    %c0_1 = arith.constant 0 : index
    %3 = vector.load %arg8[%c0, %c0_1] : memref<8x128xf32, #tpu.memory_space<vmem>>, vector<8x128xf32>
    %c0_2 = arith.constant 0 : index
    %c0_3 = arith.constant 0 : index
    %4 = vector.load %arg1[%c0_2, %c0_3] : memref<8x128xbf16, #tpu.memory_space<vmem>>, vector<8x128xbf16>
    %c0_4 = arith.constant 0 : index
    %c0_5 = arith.constant 0 : index
    %5 = vector.load %arg2[%c0_4, %c0_5] : memref<128x128xbf16, #tpu.memory_space<vmem>>, vector<128x128xbf16>
    %cst = arith.constant dense<0.000000e+00> : vector<8x128xf32>
    %6 = tpu.matmul %4, %5, %cst {dimension_numbers = #tpu.dot_dimension_numbers<[1], [0], [0], [1], [0, 0, 1, 1], [], []>} : vector<8x128xbf16>, vector<128x128xbf16>, vector<8x128xf32> -> vector<8x128xf32>
    %7 = arith.addf %3, %6 : vector<8x128xf32>
    %c0_6 = arith.constant 0 : index
    %c0_7 = arith.constant 0 : index
    %8 = vector.load %arg8[%c0_6, %c0_7] : memref<8x128xf32, #tpu.memory_space<vmem>>, vector<8x128xf32>
    tpu.vector_store %arg8[%c0_6, %c0_7], %7 {strides = array<i32>} : memref<8x128xf32, #tpu.memory_space<vmem>>, vector<8x128xf32>,
    %c0_i32_8 = arith.constant 0 : i32
    %9 = arith.cmpi eq, %arg0, %c0_i32_8 : i32
    %10 = arith.extui %9 : i1 to i32
    %c0_i32_9 = arith.constant 0 : i32
    %11 = arith.cmpi ne, %10, %c0_i32_9 : i32
    scf.if %11 {
      %c0_10 = arith.constant 0 : index
      %c0_11 = arith.constant 0 : index
      %12 = vector.load %arg8[%c0_10, %c0_11] : memref<8x128xf32, #tpu.memory_space<vmem>>, vector<8x128xf32>
      %c0_12 = arith.constant 0 : index
      %c0_13 = arith.constant 0 : index
      %13 = vector.load %arg3[%c0_12, %c0_13] : memref<128x128xf32, #tpu.memory_space<vmem>>, vector<128x128xf32>
      %cst_14 = arith.constant dense<0.000000e+00> : vector<8x128xf32>
      %14 = tpu.matmul %12, %13, %cst_14 {dimension_numbers = #tpu.dot_dimension_numbers<[1], [0], [0], [1], [0, 0, 1, 1], [], []>} : vector<8x128xf32>, vector<128x128xf32>, vector<8x128xf32> -> vector<8x128xf32>
      %c0_15 = arith.constant 0 : index
      %c0_16 = arith.constant 0 : index
      %15 = vector.load %arg4[%c0_15, %c0_16] : memref<1x128xf32, #tpu.memory_space<vmem>>, vector<1x128xf32>
      %16 = vector.broadcast %15 : vector<1x128xf32> to vector<8x128xf32>
      %17 = arith.addf %14, %16 : vector<8x128xf32>
      %cst_17 = arith.constant 0.000000e+00 : f32
      %18 = vector.broadcast %cst_17 : f32 to vector<8x128xf32>
      %19 = arith.maximumf %17, %18 : vector<8x128xf32>
      %c0_18 = arith.constant 0 : index
      %c0_19 = arith.constant 0 : index
      %20 = vector.load %arg5[%c0_18, %c0_19] : memref<128x128xf32, #tpu.memory_space<vmem>>, vector<128x128xf32>
      %cst_20 = arith.constant dense<0.000000e+00> : vector<8x128xf32>
      %21 = tpu.matmul %19, %20, %cst_20 {dimension_numbers = #tpu.dot_dimension_numbers<[1], [0], [0], [1], [0, 0, 1, 1], [], []>} : vector<8x128xf32>, vector<128x128xf32>, vector<8x128xf32> -> vector<8x128xf32>
      %c0_21 = arith.constant 0 : index
      %c0_22 = arith.constant 0 : index
      %22 = vector.load %arg6[%c0_21, %c0_22] : memref<1x128xf32, #tpu.memory_space<vmem>>, vector<1x128xf32>
      %23 = vector.broadcast %22 : vector<1x128xf32> to vector<8x128xf32>
      %24 = arith.addf %21, %23 : vector<8x128xf32>
      %c0_23 = arith.constant 0 : index
      %c0_24 = arith.constant 0 : index
      %25 = vector.load %arg7[%c0_23, %c0_24] : memref<8x128xf32, #tpu.memory_space<vmem>>, vector<8x128xf32>
      tpu.vector_store %arg7[%c0_23, %c0_24], %24 {strides = array<i32>} : memref<8x128xf32, #tpu.memory_space<vmem>>, vector<8x128xf32>,
    } else {
    }
    return
  }
  func.func @transform_0(%arg0: i32) -> (i32, i32) {
    %c0_i32 = arith.constant 0 : i32
    %c0_i32_0 = arith.constant 0 : i32
    return %c0_i32, %arg0 : i32, i32
  }
  func.func @transform_1(%arg0: i32) -> (i32, i32) {
    %c0_i32 = arith.constant 0 : i32
    %c0_i32_0 = arith.constant 0 : i32
    return %arg0, %c0_i32 : i32, i32
  }
  func.func @transform_2(%arg0: i32) -> (i32, i32) {
    %c0_i32 = arith.constant 0 : i32
    %c0_i32_0 = arith.constant 0 : i32
    %c0_i32_1 = arith.constant 0 : i32
    return %c0_i32, %c0_i32_0 : i32, i32
  }
  func.func @transform_3(%arg0: i32) -> (i32, i32) {
    %c0_i32 = arith.constant 0 : i32
    %c0_i32_0 = arith.constant 0 : i32
    %c0_i32_1 = arith.constant 0 : i32
    return %c0_i32, %c0_i32_0 : i32, i32
  }
  func.func @transform_4(%arg0: i32) -> (i32, i32) {
    %c0_i32 = arith.constant 0 : i32
    %c0_i32_0 = arith.constant 0 : i32
    %c0_i32_1 = arith.constant 0 : i32
    return %c0_i32, %c0_i32_0 : i32, i32
  }
  func.func @transform_5(%arg0: i32) -> (i32, i32) {
    %c0_i32 = arith.constant 0 : i32
    %c0_i32_0 = arith.constant 0 : i32
    %c0_i32_1 = arith.constant 0 : i32
    return %c0_i32, %c0_i32_0 : i32, i32
  }
  func.func @transform_6(%arg0: i32) -> (i32, i32) {
    %c0_i32 = arith.constant 0 : i32
    %c0_i32_0 = arith.constant 0 : i32
    %c0_i32_1 = arith.constant 0 : i32
    return %c0_i32, %c0_i32_0 : i32, i32
  }
}

</mosaic_0001>

<llo_original>
// kernel: gnn_forward.5
$region0: #{gnn_forward.5}
  #allocation0 [shape = 'u32[]', space=smem, size = 0x4, offset = 0x4, fixed_abs, tag = 'smem constant byte address 0x4 - core index']
  #allocation1 [shape = 'u32[144,128]{1,0:T(1,128)}', space=vmem, size = 0x12000, scoped, tag = 'internal scratch']
  #allocation2 [shape = 'f32[8,128]{1,0:T(8,128)}', space=vmem, size = 0x1000, scoped, tag = 'scratch operand']
  %s0 = inlined_call_operand.vmem [shape: bf16[8,128], index: 0, kind: input, shape index: {}]
  %s1 = inlined_call_operand.vmem [shape: bf16[128,128], index: 1, kind: input, shape index: {}]
  %s2 = inlined_call_operand.vmem [shape: f32[128,128], index: 2, kind: input, shape index: {}]
  %s3 = inlined_call_operand.vmem [shape: f32[1,128], index: 3, kind: input, shape index: {}]
  %s4 = inlined_call_operand.vmem [shape: f32[128,128], index: 4, kind: input, shape index: {}]
  %s5 = inlined_call_operand.vmem [shape: f32[1,128], index: 5, kind: input, shape index: {}]
  %s6 = inlined_call_operand.vmem [shape: f32[8,128], index: 6, kind: output, shape index: {}]
  %s7 = sld [smem:[#allocation0]]
  $region42: #{gnn_forward.5} parent=0
    _
  %s9 = ssub.s32 1, %s7
  %s10 = scalar_select 0, %s9, %s7
  // Predicated region
  $region2: #{gnn_forward.5} parent=0 // pred_check
    _
  $region3: #{gnn_forward.5} parent=0 // pred_check_branch
    %12 = sbr.rel (0) target = $region5
  $region4: #{gnn_forward.5} parent=0 // pred_region
    _
  $region5: #{gnn_forward.5} parent=0 // pred_fallthru
    _
  // Predicated region
  $region6: #{gnn_forward.5} parent=0 // pred_check
    _
  $region7: #{gnn_forward.5} parent=0 // pred_check_branch
    %14 = sbr.rel (0) target = $region9
  $region8: #{gnn_forward.5} parent=0 // pred_region
    _
  $region9: #{gnn_forward.5} parent=0 // pred_fallthru
    _
  // Predicated region
  $region10: #{gnn_forward.5} parent=0 // pred_check
    _
  $region11: #{gnn_forward.5} parent=0 // pred_check_branch
    %16 = sbr.rel (0) target = $region13
  $region12: #{gnn_forward.5} parent=0 // pred_region
    _
  $region13: #{gnn_forward.5} parent=0 // pred_fallthru
    _
  // Predicated region
  $region14: #{gnn_forward.5} parent=0 // pred_check
    _
  $region15: #{gnn_forward.5} parent=0 // pred_check_branch
    %18 = sbr.rel (0) target = $region17
  $region16: #{gnn_forward.5} parent=0 // pred_region
    _
  $region17: #{gnn_forward.5} parent=0 // pred_fallthru
    _
  // Predicated region
  $region18: #{gnn_forward.5} parent=0 // pred_check
    _
  $region19: #{gnn_forward.5} parent=0 // pred_check_branch
    %20 = sbr.rel (0) target = $region21
  $region20: #{gnn_forward.5} parent=0 // pred_region
    _
  $region21: #{gnn_forward.5} parent=0 // pred_fallthru
    _
  // Predicated region
  $region22: #{gnn_forward.5} parent=0 // pred_check
    _
  $region23: #{gnn_forward.5} parent=0 // pred_check_branch
    %22 = sbr.rel (0) target = $region25
  $region24: #{gnn_forward.5} parent=0 // pred_region
    _
  $region25: #{gnn_forward.5} parent=0 // pred_fallthru
    _
  %p24 = scmp.eq.s32.totalorder 0, 0
  // Predicated region
  $region26: #{gnn_forward.5} parent=0 // pred_check
    %p25 = pneg %p24
  $region27: #{gnn_forward.5} parent=0 // pred_check_branch
    %27 = sbr.rel (%p25) target = $region29
  $region28: #{gnn_forward.5} parent=0 // pred_region
    %28 = vst [vmem:[#allocation2] sm:$0xff] 0.0
  $region29: #{gnn_forward.5} parent=0 // pred_fallthru
    _
  %v29 = vld [vmem:[#allocation2] sm:$0xff]
  %v30 = vld [vmem:[%s0] sm:$0xf]
  %v31 = vld [vmem:[%s1] sm:$0xf]
  %v32 = vld [vmem:[%s1 + $0x4] sm:$0xf]
  %v33 = vld [vmem:[%s1 + $0x8] sm:$0xf]
  %v34 = vld [vmem:[%s1 + $0xc] sm:$0xf]
  %v35 = vld [vmem:[%s1 + $0x10] sm:$0xf]
  %v36 = vld [vmem:[%s1 + $0x14] sm:$0xf]
  %v37 = vld [vmem:[%s1 + $0x18] sm:$0xf]
  %v38 = vld [vmem:[%s1 + $0x1c] sm:$0xf]
  %v39 = vld [vmem:[%s1 + $0x20] sm:$0xf]
  %v40 = vld [vmem:[%s1 + $0x24] sm:$0xf]
  %v41 = vld [vmem:[%s1 + $0x28] sm:$0xf]
  %v42 = vld [vmem:[%s1 + $0x2c] sm:$0xf]
  %v43 = vld [vmem:[%s1 + $0x30] sm:$0xf]
  %v44 = vld [vmem:[%s1 + $0x34] sm:$0xf]
  %v45 = vld [vmem:[%s1 + $0x38] sm:$0xf]
  %v46 = vld [vmem:[%s1 + $0x3c] sm:$0xf]
  %v63 = vunpack.c.l.b16 %v31
  %v64 = vunpack.c.l.b16 %v32
  %v65 = vunpack.c.l.b16 %v33
  %v66 = vunpack.c.l.b16 %v34
  %v67 = vunpack.c.l.b16 %v35
  %v68 = vunpack.c.l.b16 %v36
  %v69 = vunpack.c.l.b16 %v37
  %v70 = vunpack.c.l.b16 %v38
  %v71 = vunpack.c.l.b16 %v39
  %v72 = vunpack.c.l.b16 %v40
  %v73 = vunpack.c.l.b16 %v41
  %v74 = vunpack.c.l.b16 %v42
  %v75 = vunpack.c.l.b16 %v43
  %v76 = vunpack.c.l.b16 %v44
  %v77 = vunpack.c.l.b16 %v45
  %v78 = vunpack.c.l.b16 %v46
  %v79 = vpack.c.b16 %v64, %v63
  %v80 = vpack.c.b16 %v66, %v65
  %v81 = vpack.c.b16 %v68, %v67
  %v82 = vpack.c.b16 %v70, %v69
  %v83 = vpack.c.b16 %v72, %v71
  %v84 = vpack.c.b16 %v74, %v73
  %v85 = vpack.c.b16 %v76, %v75
  %v86 = vpack.c.b16 %v78, %v77
  %95 = vmatprep.subr.bf16.mxu0 0
  %96 = vmatpush1.bf16.msra.mxu0 %v79
  %97 = vmatprep.subr.bf16.mxu0 0
  %98 = vmatpush1.bf16.msra.mxu0 %v80
  %99 = vmatprep.subr.bf16.mxu0 0
  %100 = vmatpush1.bf16.msra.mxu0 %v81
  %101 = vmatprep.subr.bf16.mxu0 0
  %102 = vmatpush1.bf16.msra.mxu0 %v82
  %103 = vmatprep.subr.bf16.mxu0 0
  %104 = vmatpush1.bf16.msra.mxu0 %v83
  %105 = vmatprep.subr.bf16.mxu0 0
  %106 = vmatpush1.bf16.msra.mxu0 %v84
  %107 = vmatprep.subr.bf16.mxu0 0
  %108 = vmatpush1.bf16.msra.mxu0 %v85
  %109 = vmatprep.subr.bf16.mxu0 0
  %110 = vmatpush1.bf16.msra.mxu0 %v86
  %111 = vmatprep.subr.bf16.mxu0 0
  %112 = vmatpush1.bf16.msra.mxu0 0
  %113 = vmatprep.subr.bf16.mxu0 0
  %114 = vmatpush1.bf16.msra.mxu0 0
  %115 = vmatprep.subr.bf16.mxu0 0
  %116 = vmatpush1.bf16.msra.mxu0 0
  %117 = vmatprep.subr.bf16.mxu0 0
  %118 = vmatpush1.bf16.msra.mxu0 0
  %119 = vmatprep.subr.bf16.mxu0 0
  %120 = vmatpush1.bf16.msra.mxu0 0
  %121 = vmatprep.subr.bf16.mxu0 0
  %122 = vmatpush1.bf16.msra.mxu0 0
  %123 = vmatprep.subr.bf16.mxu0 0
  %124 = vmatpush1.bf16.msra.mxu0 0
  %125 = vmatprep.subr.bf16.mxu0 0
  %126 = vmatpush1.bf16.msra.mxu0 0
  %127 = vmatprep.mubr.bf16.mxu0 0
  %128 = vmatmul.mubr.bf16.gmra.mrb[0].mxu0 %v30
  %v129 = vpop.f32.mrb[0].mxu0
  %v130 = vadd.f32 0.0, %v129
  %v131 = vpop.f32.mrb[0].mxu0
  %v132 = vpop.f32.mrb[0].mxu0
  %v133 = vpop.f32.mrb[0].mxu0
  %134 = vdwg.mxu0
  %v135 = vadd.f32 %v29, %v130
  %136 = vst [vmem:[#allocation2] sm:$0xff] %v135
  // Predicated region
  $region30: #{gnn_forward.5} parent=0 // pred_check
    %p137 = pneg %p24
  $region31: #{gnn_forward.5} parent=0 // pred_check_branch
    %139 = sbr.rel (%p137) target = $region33
  $region32: #{gnn_forward.5} parent=0 // pred_region
    %v140 = vld [vmem:[#allocation2] sm:$0xff]
    %v141 = vld [vmem:[%s2] sm:$0xff]
    %v142 = vld [vmem:[%s2 + $0x8] sm:$0xff]
    %v143 = vld [vmem:[%s2 + $0x10] sm:$0xff]
    %v144 = vld [vmem:[%s2 + $0x18] sm:$0xff]
    %v145 = vld [vmem:[%s2 + $0x20] sm:$0xff]
    %v146 = vld [vmem:[%s2 + $0x28] sm:$0xff]
    %v147 = vld [vmem:[%s2 + $0x30] sm:$0xff]
    %v148 = vld [vmem:[%s2 + $0x38] sm:$0xff]
    %v149 = vld [vmem:[%s2 + $0x40] sm:$0xff]
    %v150 = vld [vmem:[%s2 + $0x48] sm:$0xff]
    %v151 = vld [vmem:[%s2 + $0x50] sm:$0xff]
    %v152 = vld [vmem:[%s2 + $0x58] sm:$0xff]
    %v153 = vld [vmem:[%s2 + $0x60] sm:$0xff]
    %v154 = vld [vmem:[%s2 + $0x68] sm:$0xff]
    %v155 = vld [vmem:[%s2 + $0x70] sm:$0xff]
    %v156 = vld [vmem:[%s2 + $0x78] sm:$0xff]
    %v157 = vld [vmem:[%s3] sm:$0x1]
    %v159 = vlaneseq
    %v160 = vshrl.u32 %v159, 7
    %v161 = vsub.s32 0, %v160
    %v162 = vrot.slane %v157, %v161
    %164 = vmatprep.subr.mxu0 0.0
    %165 = vmatpush1.msra.mxu0 %v141
    %166 = vmatprep.subr.mxu0 0.0
    %167 = vmatpush1.msra.mxu0 %v142
    %168 = vmatprep.subr.mxu0 0.0
    %169 = vmatpush1.msra.mxu0 %v143
    %170 = vmatprep.subr.mxu0 0.0
    %171 = vmatpush1.msra.mxu0 %v144
    %172 = vmatprep.subr.mxu0 0.0
    %173 = vmatpush1.msra.mxu0 %v145
    %174 = vmatprep.subr.mxu0 0.0
    %175 = vmatpush1.msra.mxu0 %v146
    %176 = vmatprep.subr.mxu0 0.0
    %177 = vmatpush1.msra.mxu0 %v147
    %178 = vmatprep.subr.mxu0 0.0
    %179 = vmatpush1.msra.mxu0 %v148
    %180 = vmatprep.subr.mxu0 0.0
    %181 = vmatpush1.msra.mxu0 %v149
    %182 = vmatprep.subr.mxu0 0.0
    %183 = vmatpush1.msra.mxu0 %v150
    %184 = vmatprep.subr.mxu0 0.0
    %185 = vmatpush1.msra.mxu0 %v151
    %186 = vmatprep.subr.mxu0 0.0
    %187 = vmatpush1.msra.mxu0 %v152
    %188 = vmatprep.subr.mxu0 0.0
    %189 = vmatpush1.msra.mxu0 %v153
    %190 = vmatprep.subr.mxu0 0.0
    %191 = vmatpush1.msra.mxu0 %v154
    %192 = vmatprep.subr.mxu0 0.0
    %193 = vmatpush1.msra.mxu0 %v155
    %194 = vmatprep.subr.mxu0 0.0
    %195 = vmatpush1.msra.mxu0 %v156
    %196 = vmatprep.subr.mxu0 0.0
    %197 = vmatpush1.msra.mxu0 0.0
    %198 = vmatprep.subr.mxu0 0.0
    %199 = vmatpush1.msra.mxu0 0.0
    %200 = vmatprep.subr.mxu0 0.0
    %201 = vmatpush1.msra.mxu0 0.0
    %202 = vmatprep.subr.mxu0 0.0
    %203 = vmatpush1.msra.mxu0 0.0
    %204 = vmatprep.subr.mxu0 0.0
    %205 = vmatpush1.msra.mxu0 0.0
    %206 = vmatprep.subr.mxu0 0.0
    %207 = vmatpush1.msra.mxu0 0.0
    %208 = vmatprep.subr.mxu0 0.0
    %209 = vmatpush1.msra.mxu0 0.0
    %210 = vmatprep.subr.mxu0 0.0
    %211 = vmatpush1.msra.mxu0 0.0
    %212 = vmatprep.subr.mxu0 0.0
    %213 = vmatpush1.msra.mxu0 0.0
    %214 = vmatprep.subr.mxu0 0.0
    %215 = vmatpush1.msra.mxu0 0.0
    %216 = vmatprep.subr.mxu0 0.0
    %217 = vmatpush1.msra.mxu0 0.0
    %218 = vmatprep.subr.mxu0 0.0
    %219 = vmatpush1.msra.mxu0 0.0
    %220 = vmatprep.subr.mxu0 0.0
    %221 = vmatpush1.msra.mxu0 0.0
    %222 = vmatprep.subr.mxu0 0.0
    %223 = vmatpush1.msra.mxu0 0.0
    %224 = vmatprep.subr.mxu0 0.0
    %225 = vmatpush1.msra.mxu0 0.0
    %226 = vmatprep.subr.mxu0 0.0
    %227 = vmatpush1.msra.mxu0 0.0
    %228 = vmatprep.mubr.f32.mxu0 0.0
    %229 = vmatmul.mubr.f32.gmra.mrb[0].mxu0 %v140
    %v230 = vpop.f32.mrb[0].mxu0
    %v231 = vadd.f32 %v162, %v230
    %v232 = vpop.f32.mrb[0].mxu0
    %233 = vdwg.mxu0
    %v234 = vmax.f32 %v231, 0.0
    %v235 = vld [vmem:[%s4] sm:$0xff]
    %v236 = vld [vmem:[%s4 + $0x8] sm:$0xff]
    %v237 = vld [vmem:[%s4 + $0x10] sm:$0xff]
    %v238 = vld [vmem:[%s4 + $0x18] sm:$0xff]
    %v239 = vld [vmem:[%s4 + $0x20] sm:$0xff]
    %v240 = vld [vmem:[%s4 + $0x28] sm:$0xff]
    %v241 = vld [vmem:[%s4 + $0x30] sm:$0xff]
    %v242 = vld [vmem:[%s4 + $0x38] sm:$0xff]
    %v243 = vld [vmem:[%s4 + $0x40] sm:$0xff]
    %v244 = vld [vmem:[%s4 + $0x48] sm:$0xff]
    %v245 = vld [vmem:[%s4 + $0x50] sm:$0xff]
    %v246 = vld [vmem:[%s4 + $0x58] sm:$0xff]
    %v247 = vld [vmem:[%s4 + $0x60] sm:$0xff]
    %v248 = vld [vmem:[%s4 + $0x68] sm:$0xff]
    %v249 = vld [vmem:[%s4 + $0x70] sm:$0xff]
    %v250 = vld [vmem:[%s4 + $0x78] sm:$0xff]
    %v251 = vld [vmem:[%s5] sm:$0x1]
    %v253 = vlaneseq
    %v254 = vshrl.u32 %v253, 7
    %v255 = vsub.s32 0, %v254
    %v256 = vrot.slane %v251, %v255
    %258 = vmatprep.subr.mxu0 0.0
    %259 = vmatpush1.msra.mxu0 %v235
    %260 = vmatprep.subr.mxu0 0.0
    %261 = vmatpush1.msra.mxu0 %v236
    %262 = vmatprep.subr.mxu0 0.0
    %263 = vmatpush1.msra.mxu0 %v237
    %264 = vmatprep.subr.mxu0 0.0
    %265 = vmatpush1.msra.mxu0 %v238
    %266 = vmatprep.subr.mxu0 0.0
    %267 = vmatpush1.msra.mxu0 %v239
    %268 = vmatprep.subr.mxu0 0.0
    %269 = vmatpush1.msra.mxu0 %v240
    %270 = vmatprep.subr.mxu0 0.0
    %271 = vmatpush1.msra.mxu0 %v241
    %272 = vmatprep.subr.mxu0 0.0
    %273 = vmatpush1.msra.mxu0 %v242
    %274 = vmatprep.subr.mxu0 0.0
    %275 = vmatpush1.msra.mxu0 %v243
    %276 = vmatprep.subr.mxu0 0.0
    %277 = vmatpush1.msra.mxu0 %v244
    %278 = vmatprep.subr.mxu0 0.0
    %279 = vmatpush1.msra.mxu0 %v245
    %280 = vmatprep.subr.mxu0 0.0
    %281 = vmatpush1.msra.mxu0 %v246
    %282 = vmatprep.subr.mxu0 0.0
    %283 = vmatpush1.msra.mxu0 %v247
    %284 = vmatprep.subr.mxu0 0.0
    %285 = vmatpush1.msra.mxu0 %v248
    %286 = vmatprep.subr.mxu0 0.0
    %287 = vmatpush1.msra.mxu0 %v249
    %288 = vmatprep.subr.mxu0 0.0
    %289 = vmatpush1.msra.mxu0 %v250
    %290 = vmatprep.subr.mxu0 0.0
    %291 = vmatpush1.msra.mxu0 0.0
    %292 = vmatprep.subr.mxu0 0.0
    %293 = vmatpush1.msra.mxu0 0.0
    %294 = vmatprep.subr.mxu0 0.0
    %295 = vmatpush1.msra.mxu0 0.0
    %296 = vmatprep.subr.mxu0 0.0
    %297 = vmatpush1.msra.mxu0 0.0
    %298 = vmatprep.subr.mxu0 0.0
    %299 = vmatpush1.msra.mxu0 0.0
    %300 = vmatprep.subr.mxu0 0.0
    %301 = vmatpush1.msra.mxu0 0.0
    %302 = vmatprep.subr.mxu0 0.0
    %303 = vmatpush1.msra.mxu0 0.0
    %304 = vmatprep.subr.mxu0 0.0
    %305 = vmatpush1.msra.mxu0 0.0
    %306 = vmatprep.subr.mxu0 0.0
    %307 = vmatpush1.msra.mxu0 0.0
    %308 = vmatprep.subr.mxu0 0.0
    %309 = vmatpush1.msra.mxu0 0.0
    %310 = vmatprep.subr.mxu0 0.0
    %311 = vmatpush1.msra.mxu0 0.0
    %312 = vmatprep.subr.mxu0 0.0
    %313 = vmatpush1.msra.mxu0 0.0
    %314 = vmatprep.subr.mxu0 0.0
    %315 = vmatpush1.msra.mxu0 0.0
    %316 = vmatprep.subr.mxu0 0.0
    %317 = vmatpush1.msra.mxu0 0.0
    %318 = vmatprep.subr.mxu0 0.0
    %319 = vmatpush1.msra.mxu0 0.0
    %320 = vmatprep.subr.mxu0 0.0
    %321 = vmatpush1.msra.mxu0 0.0
    %322 = vmatprep.mubr.f32.mxu0 0.0
    %323 = vmatmul.mubr.f32.gmra.mrb[0].mxu0 %v234
    %v324 = vpop.f32.mrb[0].mxu0
    %v325 = vadd.f32 %v256, %v324
    %v326 = vpop.f32.mrb[0].mxu0
    %327 = vdwg.mxu0
    %328 = vst [vmem:[%s6] sm:$0xff] %v325
  $region33: #{gnn_forward.5} parent=0 // pred_fallthru
    _
  // Predicated region
  $region34: #{gnn_forward.5} parent=0 // pred_check
    _
  $region35: #{gnn_forward.5} parent=0 // pred_check_branch
    %330 = sbr.rel (0) target = $region37
  $region36: #{gnn_forward.5} parent=0 // pred_region
    _
  $region37: #{gnn_forward.5} parent=0 // pred_fallthru
    _
  // Predicated region
  $region38: #{gnn_forward.5} parent=0 // pred_check
    _
  $region39: #{gnn_forward.5} parent=0 // pred_check_branch
    %332 = sbr.rel (0) target = $region41
  $region40: #{gnn_forward.5} parent=0 // pred_region
    _
  $region41: #{gnn_forward.5} parent=0 // pred_fallthru
    _

// kernel: gnn_forward.4
$region0: #{gnn_forward.4}
  #allocation0 [shape = 'u32[]', space=smem, size = 0x4, offset = 0x4, fixed_abs, tag = 'smem constant byte address 0x4 - core index']
  #allocation1 [shape = 'u32[144,128]{1,0:T(1,128)}', space=vmem, size = 0x12000, scoped, tag = 'internal scratch']
  #allocation2 [shape = 'f32[128,128]{1,0:T(8,128)}', space=vmem, size = 0x10000, scoped, tag = 'scratch operand']
  %s0 = inlined_call_operand.vmem [shape: bf16[128,128], index: 0, kind: input, shape index: {}]
  %s1 = inlined_call_operand.vmem [shape: bf16[128,128], index: 1, kind: input, shape index: {}]
  %s2 = inlined_call_operand.vmem [shape: f32[1,128], index: 2, kind: input, shape index: {}]
  %s3 = inlined_call_operand.vmem [shape: bf16[128,128], index: 3, kind: output, shape index: {}]
  %s4 = sld [smem:[#allocation0]]
  $region30: #{gnn_forward.4} parent=0
    _
  %s6 = ssub.s32 1, %s4
  %s7 = scalar_select 0, %s6, %s4
  // Predicated region
  $region2: #{gnn_forward.4} parent=0 // pred_check
    _
  $region3: #{gnn_forward.4} parent=0 // pred_check_branch
    %9 = sbr.rel (0) target = $region5
  $region4: #{gnn_forward.4} parent=0 // pred_region
    _
  $region5: #{gnn_forward.4} parent=0 // pred_fallthru
    _
  // Predicated region
  $region6: #{gnn_forward.4} parent=0 // pred_check
    _
  $region7: #{gnn_forward.4} parent=0 // pred_check_branch
    %11 = sbr.rel (0) target = $region9
  $region8: #{gnn_forward.4} parent=0 // pred_region
    _
  $region9: #{gnn_forward.4} parent=0 // pred_fallthru
    _
  // Predicated region
  $region10: #{gnn_forward.4} parent=0 // pred_check
    _
  $region11: #{gnn_forward.4} parent=0 // pred_check_branch
    %13 = sbr.rel (0) target = $region13
  $region12: #{gnn_forward.4} parent=0 // pred_region
    _
  $region13: #{gnn_forward.4} parent=0 // pred_fallthru
    _
  %p15 = scmp.eq.s32.totalorder 0, 0
  // Predicated region
  $region14: #{gnn_forward.4} parent=0 // pred_check
    %p16 = pneg %p15
  $region15: #{gnn_forward.4} parent=0 // pred_check_branch
    %18 = sbr.rel (%p16) target = $region17
  $region16: #{gnn_forward.4} parent=0 // pred_region
    %19 = vst [vmem:[#allocation2] sm:$0xff] 0.0
    %20 = vst [vmem:[#allocation2 + $0x8] sm:$0xff] 0.0
    %21 = vst [vmem:[#allocation2 + $0x10] sm:$0xff] 0.0
    %22 = vst [vmem:[#allocation2 + $0x18] sm:$0xff] 0.0
    %23 = vst [vmem:[#allocation2 + $0x20] sm:$0xff] 0.0
    %24 = vst [vmem:[#allocation2 + $0x28] sm:$0xff] 0.0
    %25 = vst [vmem:[#allocation2 + $0x30] sm:$0xff] 0.0
    %26 = vst [vmem:[#allocation2 + $0x38] sm:$0xff] 0.0
    %27 = vst [vmem:[#allocation2 + $0x40] sm:$0xff] 0.0
    %28 = vst [vmem:[#allocation2 + $0x48] sm:$0xff] 0.0
    %29 = vst [vmem:[#allocation2 + $0x50] sm:$0xff] 0.0
    %30 = vst [vmem:[#allocation2 + $0x58] sm:$0xff] 0.0
    %31 = vst [vmem:[#allocation2 + $0x60] sm:$0xff] 0.0
    %32 = vst [vmem:[#allocation2 + $0x68] sm:$0xff] 0.0
    %33 = vst [vmem:[#allocation2 + $0x70] sm:$0xff] 0.0
    %34 = vst [vmem:[#allocation2 + $0x78] sm:$0xff] 0.0
  $region17: #{gnn_forward.4} parent=0 // pred_fallthru
    _
  %v35 = vld [vmem:[#allocation2] sm:$0xff]
  %v36 = vld [vmem:[#allocation2 + $0x8] sm:$0xff]
  %v37 = vld [vmem:[#allocation2 + $0x10] sm:$0xff]
  %v38 = vld [vmem:[#allocation2 + $0x18] sm:$0xff]
  %v39 = vld [vmem:[#allocation2 + $0x20] sm:$0xff]
  %v40 = vld [vmem:[#allocation2 + $0x28] sm:$0xff]
  %v41 = vld [vmem:[#allocation2 + $0x30] sm:$0xff]
  %v42 = vld [vmem:[#allocation2 + $0x38] sm:$0xff]
  %v43 = vld [vmem:[#allocation2 + $0x40] sm:$0xff]
  %v44 = vld [vmem:[#allocation2 + $0x48] sm:$0xff]
  %v45 = vld [vmem:[#allocation2 + $0x50] sm:$0xff]
  %v46 = vld [vmem:[#allocation2 + $0x58] sm:$0xff]
  %v47 = vld [vmem:[#allocation2 + $0x60] sm:$0xff]
  %v48 = vld [vmem:[#allocation2 + $0x68] sm:$0xff]
  %v49 = vld [vmem:[#allocation2 + $0x70] sm:$0xff]
  %v50 = vld [vmem:[#allocation2 + $0x78] sm:$0xff]
  %v51 = vld [vmem:[%s0] sm:$0xf]
  %v52 = vld [vmem:[%s0 + $0x4] sm:$0xf]
  %v53 = vld [vmem:[%s0 + $0x8] sm:$0xf]
  %v54 = vld [vmem:[%s0 + $0xc] sm:$0xf]
  %v55 = vld [vmem:[%s0 + $0x10] sm:$0xf]
  %v56 = vld [vmem:[%s0 + $0x14] sm:$0xf]
  %v57 = vld [vmem:[%s0 + $0x18] sm:$0xf]
  %v58 = vld [vmem:[%s0 + $0x1c] sm:$0xf]
  %v59 = vld [vmem:[%s0 + $0x20] sm:$0xf]
  %v60 = vld [vmem:[%s0 + $0x24] sm:$0xf]
  %v61 = vld [vmem:[%s0 + $0x28] sm:$0xf]
  %v62 = vld [vmem:[%s0 + $0x2c] sm:$0xf]
  %v63 = vld [vmem:[%s0 + $0x30] sm:$0xf]
  %v64 = vld [vmem:[%s0 + $0x34] sm:$0xf]
  %v65 = vld [vmem:[%s0 + $0x38] sm:$0xf]
  %v66 = vld [vmem:[%s0 + $0x3c] sm:$0xf]
  %v67 = vld [vmem:[%s1] sm:$0xf]
  %v68 = vld [vmem:[%s1 + $0x4] sm:$0xf]
  %v69 = vld [vmem:[%s1 + $0x8] sm:$0xf]
  %v70 = vld [vmem:[%s1 + $0xc] sm:$0xf]
  %v71 = vld [vmem:[%s1 + $0x10] sm:$0xf]
  %v72 = vld [vmem:[%s1 + $0x14] sm:$0xf]
  %v73 = vld [vmem:[%s1 + $0x18] sm:$0xf]
  %v74 = vld [vmem:[%s1 + $0x1c] sm:$0xf]
  %v75 = vld [vmem:[%s1 + $0x20] sm:$0xf]
  %v76 = vld [vmem:[%s1 + $0x24] sm:$0xf]
  %v77 = vld [vmem:[%s1 + $0x28] sm:$0xf]
  %v78 = vld [vmem:[%s1 + $0x2c] sm:$0xf]
  %v79 = vld [vmem:[%s1 + $0x30] sm:$0xf]
  %v80 = vld [vmem:[%s1 + $0x34] sm:$0xf]
  %v81 = vld [vmem:[%s1 + $0x38] sm:$0xf]
  %v82 = vld [vmem:[%s1 + $0x3c] sm:$0xf]
  %v99 = vunpack.c.l.b16 %v51
  %v100 = vunpack.c.l.b16 %v52
  %v101 = vunpack.c.l.b16 %v53
  %v102 = vunpack.c.l.b16 %v54
  %v103 = vunpack.c.l.b16 %v55
  %v104 = vunpack.c.l.b16 %v56
  %v105 = vunpack.c.l.b16 %v57
  %v106 = vunpack.c.l.b16 %v58
  %v107 = vunpack.c.l.b16 %v59
  %v108 = vunpack.c.l.b16 %v60
  %v109 = vunpack.c.l.b16 %v61
  %v110 = vunpack.c.l.b16 %v62
  %v111 = vunpack.c.l.b16 %v63
  %v112 = vunpack.c.l.b16 %v64
  %v113 = vunpack.c.l.b16 %v65
  %v114 = vunpack.c.l.b16 %v66
  %v115 = vpack.c.b16 %v100, %v99
  %v116 = vpack.c.b16 %v102, %v101
  %v117 = vpack.c.b16 %v104, %v103
  %v118 = vpack.c.b16 %v106, %v105
  %v119 = vpack.c.b16 %v108, %v107
  %v120 = vpack.c.b16 %v110, %v109
  %v121 = vpack.c.b16 %v112, %v111
  %v122 = vpack.c.b16 %v114, %v113
  %v147 = vunpack.c.l.b16 %v67
  %v148 = vunpack.c.l.b16 %v68
  %v149 = vunpack.c.l.b16 %v69
  %v150 = vunpack.c.l.b16 %v70
  %v151 = vunpack.c.l.b16 %v71
  %v152 = vunpack.c.l.b16 %v72
  %v153 = vunpack.c.l.b16 %v73
  %v154 = vunpack.c.l.b16 %v74
  %v155 = vunpack.c.l.b16 %v75
  %v156 = vunpack.c.l.b16 %v76
  %v157 = vunpack.c.l.b16 %v77
  %v158 = vunpack.c.l.b16 %v78
  %v159 = vunpack.c.l.b16 %v79
  %v160 = vunpack.c.l.b16 %v80
  %v161 = vunpack.c.l.b16 %v81
  %v162 = vunpack.c.l.b16 %v82
  %v163 = vpack.c.b16 %v148, %v147
  %v164 = vpack.c.b16 %v150, %v149
  %v165 = vpack.c.b16 %v152, %v151
  %v166 = vpack.c.b16 %v154, %v153
  %v167 = vpack.c.b16 %v156, %v155
  %v168 = vpack.c.b16 %v158, %v157
  %v169 = vpack.c.b16 %v160, %v159
  %v170 = vpack.c.b16 %v162, %v161
  %179 = vmatprep.subr.bf16.mxu0 0
  %180 = vmatpush1.bf16.msra.mxu0 %v163
  %181 = vmatprep.subr.bf16.mxu0 0
  %182 = vmatpush1.bf16.msra.mxu0 %v164
  %183 = vmatprep.subr.bf16.mxu0 0
  %184 = vmatpush1.bf16.msra.mxu0 %v165
  %185 = vmatprep.subr.bf16.mxu0 0
  %186 = vmatpush1.bf16.msra.mxu0 %v166
  %187 = vmatprep.subr.bf16.mxu0 0
  %188 = vmatpush1.bf16.msra.mxu0 %v167
  %189 = vmatprep.subr.bf16.mxu0 0
  %190 = vmatpush1.bf16.msra.mxu0 %v168
  %191 = vmatprep.subr.bf16.mxu0 0
  %192 = vmatpush1.bf16.msra.mxu0 %v169
  %193 = vmatprep.subr.bf16.mxu0 0
  %194 = vmatpush1.bf16.msra.mxu0 %v170
  %195 = vmatprep.subr.bf16.mxu0 0
  %196 = vmatpush1.bf16.msra.mxu0 0
  %197 = vmatprep.subr.bf16.mxu0 0
  %198 = vmatpush1.bf16.msra.mxu0 0
  %199 = vmatprep.subr.bf16.mxu0 0
  %200 = vmatpush1.bf16.msra.mxu0 0
  %201 = vmatprep.subr.bf16.mxu0 0
  %202 = vmatpush1.bf16.msra.mxu0 0
  %203 = vmatprep.subr.bf16.mxu0 0
  %204 = vmatpush1.bf16.msra.mxu0 0
  %205 = vmatprep.subr.bf16.mxu0 0
  %206 = vmatpush1.bf16.msra.mxu0 0
  %207 = vmatprep.subr.bf16.mxu0 0
  %208 = vmatpush1.bf16.msra.mxu0 0
  %209 = vmatprep.subr.bf16.mxu0 0
  %210 = vmatpush1.bf16.msra.mxu0 0
  %211 = vmatprep.mubr.bf16.mxu0 0
  %212 = vmatmul.mubr.bf16.gmra.mrb[0].mxu0 %v115
  %v213 = vpop.f32.mrb[0].mxu0
  %v214 = vadd.f32 0.0, %v213
  %v215 = vpop.f32.mrb[0].mxu0
  %v216 = vpop.f32.mrb[0].mxu0
  %v217 = vadd.f32 0.0, %v216
  %v218 = vpop.f32.mrb[0].mxu0
  %219 = vmatprep.mubr.bf16.mxu0 0
  %220 = vmatmul.mubr.bf16.gmra.mrb[0].mxu0 %v116
  %v221 = vpop.f32.mrb[0].mxu0
  %v222 = vadd.f32 0.0, %v221
  %v223 = vpop.f32.mrb[0].mxu0
  %v224 = vpop.f32.mrb[0].mxu0
  %v225 = vadd.f32 0.0, %v224
  %v226 = vpop.f32.mrb[0].mxu0
  %227 = vmatprep.mubr.bf16.mxu0 0
  %228 = vmatmul.mubr.bf16.gmra.mrb[0].mxu0 %v117
  %v229 = vpop.f32.mrb[0].mxu0
  %v230 = vadd.f32 0.0, %v229
  %v231 = vpop.f32.mrb[0].mxu0
  %v232 = vpop.f32.mrb[0].mxu0
  %v233 = vadd.f32 0.0, %v232
  %v234 = vpop.f32.mrb[0].mxu0
  %235 = vmatprep.mubr.bf16.mxu0 0
  %236 = vmatmul.mubr.bf16.gmra.mrb[0].mxu0 %v118
  %v237 = vpop.f32.mrb[0].mxu0
  %v238 = vadd.f32 0.0, %v237
  %v239 = vpop.f32.mrb[0].mxu0
  %v240 = vpop.f32.mrb[0].mxu0
  %v241 = vadd.f32 0.0, %v240
  %v242 = vpop.f32.mrb[0].mxu0
  %243 = vmatprep.mubr.bf16.mxu0 0
  %244 = vmatmul.mubr.bf16.gmra.mrb[0].mxu0 %v119
  %v245 = vpop.f32.mrb[0].mxu0
  %v246 = vadd.f32 0.0, %v245
  %v247 = vpop.f32.mrb[0].mxu0
  %v248 = vpop.f32.mrb[0].mxu0
  %v249 = vadd.f32 0.0, %v248
  %v250 = vpop.f32.mrb[0].mxu0
  %251 = vmatprep.mubr.bf16.mxu0 0
  %252 = vmatmul.mubr.bf16.gmra.mrb[0].mxu0 %v120
  %v253 = vpop.f32.mrb[0].mxu0
  %v254 = vadd.f32 0.0, %v253
  %v255 = vpop.f32.mrb[0].mxu0
  %v256 = vpop.f32.mrb[0].mxu0
  %v257 = vadd.f32 0.0, %v256
  %v258 = vpop.f32.mrb[0].mxu0
  %259 = vmatprep.mubr.bf16.mxu0 0
  %260 = vmatmul.mubr.bf16.gmra.mrb[0].mxu0 %v121
  %v261 = vpop.f32.mrb[0].mxu0
  %v262 = vadd.f32 0.0, %v261
  %v263 = vpop.f32.mrb[0].mxu0
  %v264 = vpop.f32.mrb[0].mxu0
  %v265 = vadd.f32 0.0, %v264
  %v266 = vpop.f32.mrb[0].mxu0
  %267 = vmatprep.mubr.bf16.mxu0 0
  %268 = vmatmul.mubr.bf16.gmra.mrb[0].mxu0 %v122
  %v269 = vpop.f32.mrb[0].mxu0
  %v270 = vadd.f32 0.0, %v269
  %v271 = vpop.f32.mrb[0].mxu0
  %v272 = vpop.f32.mrb[0].mxu0
  %v273 = vadd.f32 0.0, %v272
  %v274 = vpop.f32.mrb[0].mxu0
  %275 = vdwg.mxu0
  %v276 = vadd.f32 %v35, %v214
  %v277 = vadd.f32 %v36, %v217
  %v278 = vadd.f32 %v37, %v222
  %v279 = vadd.f32 %v38, %v225
  %v280 = vadd.f32 %v39, %v230
  %v281 = vadd.f32 %v40, %v233
  %v282 = vadd.f32 %v41, %v238
  %v283 = vadd.f32 %v42, %v241
  %v284 = vadd.f32 %v43, %v246
  %v285 = vadd.f32 %v44, %v249
  %v286 = vadd.f32 %v45, %v254
  %v287 = vadd.f32 %v46, %v257
  %v288 = vadd.f32 %v47, %v262
  %v289 = vadd.f32 %v48, %v265
  %v290 = vadd.f32 %v49, %v270
  %v291 = vadd.f32 %v50, %v273
  %292 = vst [vmem:[#allocation2] sm:$0xff] %v276
  %293 = vst [vmem:[#allocation2 + $0x8] sm:$0xff] %v277
  %294 = vst [vmem:[#allocation2 + $0x10] sm:$0xff] %v278
  %295 = vst [vmem:[#allocation2 + $0x18] sm:$0xff] %v279
  %296 = vst [vmem:[#allocation2 + $0x20] sm:$0xff] %v280
  %297 = vst [vmem:[#allocation2 + $0x28] sm:$0xff] %v281
  %298 = vst [vmem:[#allocation2 + $0x30] sm:$0xff] %v282
  %299 = vst [vmem:[#allocation2 + $0x38] sm:$0xff] %v283
  %300 = vst [vmem:[#allocation2 + $0x40] sm:$0xff] %v284
  %301 = vst [vmem:[#allocation2 + $0x48] sm:$0xff] %v285
  %302 = vst [vmem:[#allocation2 + $0x50] sm:$0xff] %v286
  %303 = vst [vmem:[#allocation2 + $0x58] sm:$0xff] %v287
  %304 = vst [vmem:[#allocation2 + $0x60] sm:$0xff] %v288
  %305 = vst [vmem:[#allocation2 + $0x68] sm:$0xff] %v289
  %306 = vst [vmem:[#allocation2 + $0x70] sm:$0xff] %v290
  %307 = vst [vmem:[#allocation2 + $0x78] sm:$0xff] %v291
  // Predicated region
  $region18: #{gnn_forward.4} parent=0 // pred_check
    %p308 = pneg %p15
  $region19: #{gnn_forward.4} parent=0 // pred_check_branch
    %310 = sbr.rel (%p308) target = $region21
  $region20: #{gnn_forward.4} parent=0 // pred_region
    %v311 = vld [vmem:[#allocation2] sm:$0xff]
    %v312 = vld [vmem:[#allocation2 + $0x8] sm:$0xff]
    %v313 = vld [vmem:[#allocation2 + $0x10] sm:$0xff]
    %v314 = vld [vmem:[#allocation2 + $0x18] sm:$0xff]
    %v315 = vld [vmem:[#allocation2 + $0x20] sm:$0xff]
    %v316 = vld [vmem:[#allocation2 + $0x28] sm:$0xff]
    %v317 = vld [vmem:[#allocation2 + $0x30] sm:$0xff]
    %v318 = vld [vmem:[#allocation2 + $0x38] sm:$0xff]
    %v319 = vld [vmem:[#allocation2 + $0x40] sm:$0xff]
    %v320 = vld [vmem:[#allocation2 + $0x48] sm:$0xff]
    %v321 = vld [vmem:[#allocation2 + $0x50] sm:$0xff]
    %v322 = vld [vmem:[#allocation2 + $0x58] sm:$0xff]
    %v323 = vld [vmem:[#allocation2 + $0x60] sm:$0xff]
    %v324 = vld [vmem:[#allocation2 + $0x68] sm:$0xff]
    %v325 = vld [vmem:[#allocation2 + $0x70] sm:$0xff]
    %v326 = vld [vmem:[#allocation2 + $0x78] sm:$0xff]
    %v327 = vld [vmem:[%s2] sm:$0x1]
    %v329 = vlaneseq
    %v330 = vshrl.u32 %v329, 7
    %v331 = vsub.s32 0, %v330
    %v332 = vrot.slane %v327, %v331
    %v334 = vadd.f32 %v311, %v332
    %v335 = vadd.f32 %v312, %v332
    %v336 = vadd.f32 %v313, %v332
    %v337 = vadd.f32 %v314, %v332
    %v338 = vadd.f32 %v315, %v332
    %v339 = vadd.f32 %v316, %v332
    %v340 = vadd.f32 %v317, %v332
    %v341 = vadd.f32 %v318, %v332
    %v342 = vadd.f32 %v319, %v332
    %v343 = vadd.f32 %v320, %v332
    %v344 = vadd.f32 %v321, %v332
    %v345 = vadd.f32 %v322, %v332
    %v346 = vadd.f32 %v323, %v332
    %v347 = vadd.f32 %v324, %v332
    %v348 = vadd.f32 %v325, %v332
    %v349 = vadd.f32 %v326, %v332
    %v350 = vmax.f32 %v334, 0.0
    %v351 = vmax.f32 %v335, 0.0
    %v352 = vmax.f32 %v336, 0.0
    %v353 = vmax.f32 %v337, 0.0
    %v354 = vmax.f32 %v338, 0.0
    %v355 = vmax.f32 %v339, 0.0
    %v356 = vmax.f32 %v340, 0.0
    %v357 = vmax.f32 %v341, 0.0
    %v358 = vmax.f32 %v342, 0.0
    %v359 = vmax.f32 %v343, 0.0
    %v360 = vmax.f32 %v344, 0.0
    %v361 = vmax.f32 %v345, 0.0
    %v362 = vmax.f32 %v346, 0.0
    %v363 = vmax.f32 %v347, 0.0
    %v364 = vmax.f32 %v348, 0.0
    %v365 = vmax.f32 %v349, 0.0
    %v366 = vpack.c.bf16 %v351, %v350
    %v367 = vpack.c.bf16 %v353, %v352
    %v368 = vpack.c.bf16 %v355, %v354
    %v369 = vpack.c.bf16 %v357, %v356
    %v370 = vpack.c.bf16 %v359, %v358
    %v371 = vpack.c.bf16 %v361, %v360
    %v372 = vpack.c.bf16 %v363, %v362
    %v373 = vpack.c.bf16 %v365, %v364
    %v382 = vunpack.c.l.b16 %v366
    %v383 = vunpack.c.h.b16 %v366
    %v384 = vunpack.c.l.b16 %v367
    %v385 = vunpack.c.h.b16 %v367
    %v386 = vunpack.c.l.b16 %v368
    %v387 = vunpack.c.h.b16 %v368
    %v388 = vunpack.c.l.b16 %v369
    %v389 = vunpack.c.h.b16 %v369
    %v390 = vunpack.c.l.b16 %v370
    %v391 = vunpack.c.h.b16 %v370
    %v392 = vunpack.c.l.b16 %v371
    %v393 = vunpack.c.h.b16 %v371
    %v394 = vunpack.c.l.b16 %v372
    %v395 = vunpack.c.h.b16 %v372
    %v396 = vunpack.c.l.b16 %v373
    %v397 = vunpack.c.h.b16 %v373
    %v398 = vpack.c.b16 %v382, %v382
    %v399 = vpack.c.b16 %v383, %v383
    %v400 = vpack.c.b16 %v384, %v384
    %v401 = vpack.c.b16 %v385, %v385
    %v402 = vpack.c.b16 %v386, %v386
    %v403 = vpack.c.b16 %v387, %v387
    %v404 = vpack.c.b16 %v388, %v388
    %v405 = vpack.c.b16 %v389, %v389
    %v406 = vpack.c.b16 %v390, %v390
    %v407 = vpack.c.b16 %v391, %v391
    %v408 = vpack.c.b16 %v392, %v392
    %v409 = vpack.c.b16 %v393, %v393
    %v410 = vpack.c.b16 %v394, %v394
    %v411 = vpack.c.b16 %v395, %v395
    %v412 = vpack.c.b16 %v396, %v396
    %v413 = vpack.c.b16 %v397, %v397
    %430 = vst [vmem:[%s3] sm:$0xf] %v398
    %431 = vst [vmem:[%s3 + $0x4] sm:$0xf] %v399
    %432 = vst [vmem:[%s3 + $0x8] sm:$0xf] %v400
    %433 = vst [vmem:[%s3 + $0xc] sm:$0xf] %v401
    %434 = vst [vmem:[%s3 + $0x10] sm:$0xf] %v402
    %435 = vst [vmem:[%s3 + $0x14] sm:$0xf] %v403
    %436 = vst [vmem:[%s3 + $0x18] sm:$0xf] %v404
    %437 = vst [vmem:[%s3 + $0x1c] sm:$0xf] %v405
    %438 = vst [vmem:[%s3 + $0x20] sm:$0xf] %v406
    %439 = vst [vmem:[%s3 + $0x24] sm:$0xf] %v407
    %440 = vst [vmem:[%s3 + $0x28] sm:$0xf] %v408
    %441 = vst [vmem:[%s3 + $0x2c] sm:$0xf] %v409
    %442 = vst [vmem:[%s3 + $0x30] sm:$0xf] %v410
    %443 = vst [vmem:[%s3 + $0x34] sm:$0xf] %v411
    %444 = vst [vmem:[%s3 + $0x38] sm:$0xf] %v412
    %445 = vst [vmem:[%s3 + $0x3c] sm:$0xf] %v413
  $region21: #{gnn_forward.4} parent=0 // pred_fallthru
    _
  // Predicated region
  $region22: #{gnn_forward.4} parent=0 // pred_check
    _
  $region23: #{gnn_forward.4} parent=0 // pred_check_branch
    %447 = sbr.rel (0) target = $region25
  $region24: #{gnn_forward.4} parent=0 // pred_region
    _
  $region25: #{gnn_forward.4} parent=0 // pred_fallthru
    _
  // Predicated region
  $region26: #{gnn_forward.4} parent=0 // pred_check
    _
  $region27: #{gnn_forward.4} parent=0 // pred_check_branch
    %449 = sbr.rel (0) target = $region29
  $region28: #{gnn_forward.4} parent=0 // pred_region
    _
  $region29: #{gnn_forward.4} parent=0 // pred_fallthru
    _

// kernel: gnn_forward.3
$region0: #{gnn_forward.3}
  #allocation0 [shape = 'u32[]', space=smem, size = 0x4, offset = 0x4, fixed_abs, tag = 'smem constant byte address 0x4 - core index']
  #allocation1 [shape = 'u32[144,128]{1,0:T(1,128)}', space=vmem, size = 0x12000, scoped, tag = 'internal scratch']
  #allocation2 [shape = 'f32[128,8]{1,0:T(8,128)}', space=vmem, size = 0x10000, scoped, tag = 'scratch operand']
  %s0 = inlined_call_operand.vmem [shape: bf16[128,128], index: 0, kind: input, shape index: {}]
  %s1 = inlined_call_operand.vmem [shape: bf16[128,8], index: 1, kind: input, shape index: {}]
  %s2 = inlined_call_operand.vmem [shape: f32[1,128], index: 2, kind: input, shape index: {}]
  %s3 = inlined_call_operand.vmem [shape: f32[1,128], index: 3, kind: input, shape index: {}]
  %s4 = inlined_call_operand.vmem [shape: bf16[128,128], index: 4, kind: input, shape index: {}]
  %s5 = inlined_call_operand.vmem [shape: bf16[128,128], index: 5, kind: output, shape index: {}]
  %s6 = sld [smem:[#allocation0]]
  $region38: #{gnn_forward.3} parent=0
    _
  %s8 = ssub.s32 1, %s6
  %s9 = scalar_select 0, %s8, %s6
  // Predicated region
  $region2: #{gnn_forward.3} parent=0 // pred_check
    _
  $region3: #{gnn_forward.3} parent=0 // pred_check_branch
    %11 = sbr.rel (0) target = $region5
  $region4: #{gnn_forward.3} parent=0 // pred_region
    _
  $region5: #{gnn_forward.3} parent=0 // pred_fallthru
    _
  // Predicated region
  $region6: #{gnn_forward.3} parent=0 // pred_check
    _
  $region7: #{gnn_forward.3} parent=0 // pred_check_branch
    %13 = sbr.rel (0) target = $region9
  $region8: #{gnn_forward.3} parent=0 // pred_region
    _
  $region9: #{gnn_forward.3} parent=0 // pred_fallthru
    _
  // Predicated region
  $region10: #{gnn_forward.3} parent=0 // pred_check
    _
  $region11: #{gnn_forward.3} parent=0 // pred_check_branch
    %15 = sbr.rel (0) target = $region13
  $region12: #{gnn_forward.3} parent=0 // pred_region
    _
  $region13: #{gnn_forward.3} parent=0 // pred_fallthru
    _
  // Predicated region
  $region14: #{gnn_forward.3} parent=0 // pred_check
    _
  $region15: #{gnn_forward.3} parent=0 // pred_check_branch
    %17 = sbr.rel (0) target = $region17
  $region16: #{gnn_forward.3} parent=0 // pred_region
    _
  $region17: #{gnn_forward.3} parent=0 // pred_fallthru
    _
  // Predicated region
  $region18: #{gnn_forward.3} parent=0 // pred_check
    _
  $region19: #{gnn_forward.3} parent=0 // pred_check_branch
    %19 = sbr.rel (0) target = $region21
  $region20: #{gnn_forward.3} parent=0 // pred_region
    _
  $region21: #{gnn_forward.3} parent=0 // pred_fallthru
    _
  %p21 = scmp.eq.s32.totalorder 0, 0
  // Predicated region
  $region22: #{gnn_forward.3} parent=0 // pred_check
    %p22 = pneg %p21
  $region23: #{gnn_forward.3} parent=0 // pred_check_branch
    %24 = sbr.rel (%p22) target = $region25
  $region24: #{gnn_forward.3} parent=0 // pred_region
    %vm25 = vcmask 64512
    %26 = vst.msk [vmem:[#allocation2] sm:$0xff] %vm25, 0.0
    %27 = vst.msk [vmem:[#allocation2 + $0x8] sm:$0xff] %vm25, 0.0
    %28 = vst.msk [vmem:[#allocation2 + $0x10] sm:$0xff] %vm25, 0.0
    %29 = vst.msk [vmem:[#allocation2 + $0x18] sm:$0xff] %vm25, 0.0
    %30 = vst.msk [vmem:[#allocation2 + $0x20] sm:$0xff] %vm25, 0.0
    %31 = vst.msk [vmem:[#allocation2 + $0x28] sm:$0xff] %vm25, 0.0
    %32 = vst.msk [vmem:[#allocation2 + $0x30] sm:$0xff] %vm25, 0.0
    %33 = vst.msk [vmem:[#allocation2 + $0x38] sm:$0xff] %vm25, 0.0
    %34 = vst.msk [vmem:[#allocation2 + $0x40] sm:$0xff] %vm25, 0.0
    %35 = vst.msk [vmem:[#allocation2 + $0x48] sm:$0xff] %vm25, 0.0
    %36 = vst.msk [vmem:[#allocation2 + $0x50] sm:$0xff] %vm25, 0.0
    %37 = vst.msk [vmem:[#allocation2 + $0x58] sm:$0xff] %vm25, 0.0
    %38 = vst.msk [vmem:[#allocation2 + $0x60] sm:$0xff] %vm25, 0.0
    %39 = vst.msk [vmem:[#allocation2 + $0x68] sm:$0xff] %vm25, 0.0
    %40 = vst.msk [vmem:[#allocation2 + $0x70] sm:$0xff] %vm25, 0.0
    %41 = vst.msk [vmem:[#allocation2 + $0x78] sm:$0xff] %vm25, 0.0
  $region25: #{gnn_forward.3} parent=0 // pred_fallthru
    _
  %v42 = vld [vmem:[#allocation2] sm:$0xff]
  %v43 = vld [vmem:[#allocation2 + $0x8] sm:$0xff]
  %v44 = vld [vmem:[#allocation2 + $0x10] sm:$0xff]
  %v45 = vld [vmem:[#allocation2 + $0x18] sm:$0xff]
  %v46 = vld [vmem:[#allocation2 + $0x20] sm:$0xff]
  %v47 = vld [vmem:[#allocation2 + $0x28] sm:$0xff]
  %v48 = vld [vmem:[#allocation2 + $0x30] sm:$0xff]
  %v49 = vld [vmem:[#allocation2 + $0x38] sm:$0xff]
  %v50 = vld [vmem:[#allocation2 + $0x40] sm:$0xff]
  %v51 = vld [vmem:[#allocation2 + $0x48] sm:$0xff]
  %v52 = vld [vmem:[#allocation2 + $0x50] sm:$0xff]
  %v53 = vld [vmem:[#allocation2 + $0x58] sm:$0xff]
  %v54 = vld [vmem:[#allocation2 + $0x60] sm:$0xff]
  %v55 = vld [vmem:[#allocation2 + $0x68] sm:$0xff]
  %v56 = vld [vmem:[#allocation2 + $0x70] sm:$0xff]
  %v57 = vld [vmem:[#allocation2 + $0x78] sm:$0xff]
  %v58 = vld [vmem:[%s0] sm:$0xf]
  %v59 = vld [vmem:[%s0 + $0x4] sm:$0xf]
  %v60 = vld [vmem:[%s0 + $0x8] sm:$0xf]
  %v61 = vld [vmem:[%s0 + $0xc] sm:$0xf]
  %v62 = vld [vmem:[%s0 + $0x10] sm:$0xf]
  %v63 = vld [vmem:[%s0 + $0x14] sm:$0xf]
  %v64 = vld [vmem:[%s0 + $0x18] sm:$0xf]
  %v65 = vld [vmem:[%s0 + $0x1c] sm:$0xf]
  %v66 = vld [vmem:[%s0 + $0x20] sm:$0xf]
  %v67 = vld [vmem:[%s0 + $0x24] sm:$0xf]
  %v68 = vld [vmem:[%s0 + $0x28] sm:$0xf]
  %v69 = vld [vmem:[%s0 + $0x2c] sm:$0xf]
  %v70 = vld [vmem:[%s0 + $0x30] sm:$0xf]
  %v71 = vld [vmem:[%s0 + $0x34] sm:$0xf]
  %v72 = vld [vmem:[%s0 + $0x38] sm:$0xf]
  %v73 = vld [vmem:[%s0 + $0x3c] sm:$0xf]
  %v74 = vld [vmem:[%s1] sm:$0xf]
  %v75 = vld [vmem:[%s1 + $0x4] sm:$0xf]
  %v76 = vld [vmem:[%s1 + $0x8] sm:$0xf]
  %v77 = vld [vmem:[%s1 + $0xc] sm:$0xf]
  %v78 = vld [vmem:[%s1 + $0x10] sm:$0xf]
  %v79 = vld [vmem:[%s1 + $0x14] sm:$0xf]
  %v80 = vld [vmem:[%s1 + $0x18] sm:$0xf]
  %v81 = vld [vmem:[%s1 + $0x1c] sm:$0xf]
  %v82 = vld [vmem:[%s1 + $0x20] sm:$0xf]
  %v83 = vld [vmem:[%s1 + $0x24] sm:$0xf]
  %v84 = vld [vmem:[%s1 + $0x28] sm:$0xf]
  %v85 = vld [vmem:[%s1 + $0x2c] sm:$0xf]
  %v86 = vld [vmem:[%s1 + $0x30] sm:$0xf]
  %v87 = vld [vmem:[%s1 + $0x34] sm:$0xf]
  %v88 = vld [vmem:[%s1 + $0x38] sm:$0xf]
  %v89 = vld [vmem:[%s1 + $0x3c] sm:$0xf]
  %v106 = vunpack.c.l.b16 %v58
  %v107 = vunpack.c.l.b16 %v59
  %v108 = vunpack.c.l.b16 %v60
  %v109 = vunpack.c.l.b16 %v61
  %v110 = vunpack.c.l.b16 %v62
  %v111 = vunpack.c.l.b16 %v63
  %v112 = vunpack.c.l.b16 %v64
  %v113 = vunpack.c.l.b16 %v65
  %v114 = vunpack.c.l.b16 %v66
  %v115 = vunpack.c.l.b16 %v67
  %v116 = vunpack.c.l.b16 %v68
  %v117 = vunpack.c.l.b16 %v69
  %v118 = vunpack.c.l.b16 %v70
  %v119 = vunpack.c.l.b16 %v71
  %v120 = vunpack.c.l.b16 %v72
  %v121 = vunpack.c.l.b16 %v73
  %v122 = vpack.c.b16 %v107, %v106
  %v123 = vpack.c.b16 %v109, %v108
  %v124 = vpack.c.b16 %v111, %v110
  %v125 = vpack.c.b16 %v113, %v112
  %v126 = vpack.c.b16 %v115, %v114
  %v127 = vpack.c.b16 %v117, %v116
  %v128 = vpack.c.b16 %v119, %v118
  %v129 = vpack.c.b16 %v121, %v120
  %v154 = vunpack.c.l.b16 %v74
  %v155 = vunpack.c.l.b16 %v75
  %v156 = vunpack.c.l.b16 %v76
  %v157 = vunpack.c.l.b16 %v77
  %v158 = vunpack.c.l.b16 %v78
  %v159 = vunpack.c.l.b16 %v79
  %v160 = vunpack.c.l.b16 %v80
  %v161 = vunpack.c.l.b16 %v81
  %v162 = vunpack.c.l.b16 %v82
  %v163 = vunpack.c.l.b16 %v83
  %v164 = vunpack.c.l.b16 %v84
  %v165 = vunpack.c.l.b16 %v85
  %v166 = vunpack.c.l.b16 %v86
  %v167 = vunpack.c.l.b16 %v87
  %v168 = vunpack.c.l.b16 %v88
  %v169 = vunpack.c.l.b16 %v89
  %v170 = vpack.c.b16 %v155, %v154
  %v171 = vpack.c.b16 %v157, %v156
  %v172 = vpack.c.b16 %v159, %v158
  %v173 = vpack.c.b16 %v161, %v160
  %v174 = vpack.c.b16 %v163, %v162
  %v175 = vpack.c.b16 %v165, %v164
  %v176 = vpack.c.b16 %v167, %v166
  %v177 = vpack.c.b16 %v169, %v168
  %186 = vmatprep.subr.bf16.mxu0 0
  %187 = vmatpush1.bf16.msra.mxu0 %v170
  %188 = vmatprep.subr.bf16.mxu0 0
  %189 = vmatpush1.bf16.msra.mxu0 %v171
  %190 = vmatprep.subr.bf16.mxu0 0
  %191 = vmatpush1.bf16.msra.mxu0 %v172
  %192 = vmatprep.subr.bf16.mxu0 0
  %193 = vmatpush1.bf16.msra.mxu0 %v173
  %194 = vmatprep.subr.bf16.mxu0 0
  %195 = vmatpush1.bf16.msra.mxu0 %v174
  %196 = vmatprep.subr.bf16.mxu0 0
  %197 = vmatpush1.bf16.msra.mxu0 %v175
  %198 = vmatprep.subr.bf16.mxu0 0
  %199 = vmatpush1.bf16.msra.mxu0 %v176
  %200 = vmatprep.subr.bf16.mxu0 0
  %201 = vmatpush1.bf16.msra.mxu0 %v177
  %202 = vmatprep.subr.bf16.mxu0 0
  %203 = vmatpush1.bf16.msra.mxu0 0
  %204 = vmatprep.subr.bf16.mxu0 0
  %205 = vmatpush1.bf16.msra.mxu0 0
  %206 = vmatprep.subr.bf16.mxu0 0
  %207 = vmatpush1.bf16.msra.mxu0 0
  %208 = vmatprep.subr.bf16.mxu0 0
  %209 = vmatpush1.bf16.msra.mxu0 0
  %210 = vmatprep.subr.bf16.mxu0 0
  %211 = vmatpush1.bf16.msra.mxu0 0
  %212 = vmatprep.subr.bf16.mxu0 0
  %213 = vmatpush1.bf16.msra.mxu0 0
  %214 = vmatprep.subr.bf16.mxu0 0
  %215 = vmatpush1.bf16.msra.mxu0 0
  %216 = vmatprep.subr.bf16.mxu0 0
  %217 = vmatpush1.bf16.msra.mxu0 0
  %218 = vmatprep.mubr.bf16.mxu0 0
  %219 = vmatmul.mubr.bf16.gmra.mrb[0].mxu0 %v122
  %v220 = vpop.f32.mrb[0].mxu0
  %v221 = vadd.f32 0.0, %v220
  %v222 = vpop.f32.mrb[0].mxu0
  %v223 = vpop.f32.mrb[0].mxu0
  %v224 = vadd.f32 0.0, %v223
  %v225 = vpop.f32.mrb[0].mxu0
  %226 = vmatprep.mubr.bf16.mxu0 0
  %227 = vmatmul.mubr.bf16.gmra.mrb[0].mxu0 %v123
  %v228 = vpop.f32.mrb[0].mxu0
  %v229 = vadd.f32 0.0, %v228
  %v230 = vpop.f32.mrb[0].mxu0
  %v231 = vpop.f32.mrb[0].mxu0
  %v232 = vadd.f32 0.0, %v231
  %v233 = vpop.f32.mrb[0].mxu0
  %234 = vmatprep.mubr.bf16.mxu0 0
  %235 = vmatmul.mubr.bf16.gmra.mrb[0].mxu0 %v124
  %v236 = vpop.f32.mrb[0].mxu0
  %v237 = vadd.f32 0.0, %v236
  %v238 = vpop.f32.mrb[0].mxu0
  %v239 = vpop.f32.mrb[0].mxu0
  %v240 = vadd.f32 0.0, %v239
  %v241 = vpop.f32.mrb[0].mxu0
  %242 = vmatprep.mubr.bf16.mxu0 0
  %243 = vmatmul.mubr.bf16.gmra.mrb[0].mxu0 %v125
  %v244 = vpop.f32.mrb[0].mxu0
  %v245 = vadd.f32 0.0, %v244
  %v246 = vpop.f32.mrb[0].mxu0
  %v247 = vpop.f32.mrb[0].mxu0
  %v248 = vadd.f32 0.0, %v247
  %v249 = vpop.f32.mrb[0].mxu0
  %250 = vmatprep.mubr.bf16.mxu0 0
  %251 = vmatmul.mubr.bf16.gmra.mrb[0].mxu0 %v126
  %v252 = vpop.f32.mrb[0].mxu0
  %v253 = vadd.f32 0.0, %v252
  %v254 = vpop.f32.mrb[0].mxu0
  %v255 = vpop.f32.mrb[0].mxu0
  %v256 = vadd.f32 0.0, %v255
  %v257 = vpop.f32.mrb[0].mxu0
  %258 = vmatprep.mubr.bf16.mxu0 0
  %259 = vmatmul.mubr.bf16.gmra.mrb[0].mxu0 %v127
  %v260 = vpop.f32.mrb[0].mxu0
  %v261 = vadd.f32 0.0, %v260
  %v262 = vpop.f32.mrb[0].mxu0
  %v263 = vpop.f32.mrb[0].mxu0
  %v264 = vadd.f32 0.0, %v263
  %v265 = vpop.f32.mrb[0].mxu0
  %266 = vmatprep.mubr.bf16.mxu0 0
  %267 = vmatmul.mubr.bf16.gmra.mrb[0].mxu0 %v128
  %v268 = vpop.f32.mrb[0].mxu0
  %v269 = vadd.f32 0.0, %v268
  %v270 = vpop.f32.mrb[0].mxu0
  %v271 = vpop.f32.mrb[0].mxu0
  %v272 = vadd.f32 0.0, %v271
  %v273 = vpop.f32.mrb[0].mxu0
  %274 = vmatprep.mubr.bf16.mxu0 0
  %275 = vmatmul.mubr.bf16.gmra.mrb[0].mxu0 %v129
  %v276 = vpop.f32.mrb[0].mxu0
  %v277 = vadd.f32 0.0, %v276
  %v278 = vpop.f32.mrb[0].mxu0
  %v279 = vpop.f32.mrb[0].mxu0
  %v280 = vadd.f32 0.0, %v279
  %v281 = vpop.f32.mrb[0].mxu0
  %282 = vdwg.mxu0
  %v283 = vadd.f32 %v42, %v221
  %v284 = vadd.f32 %v43, %v224
  %v285 = vadd.f32 %v44, %v229
  %v286 = vadd.f32 %v45, %v232
  %v287 = vadd.f32 %v46, %v237
  %v288 = vadd.f32 %v47, %v240
  %v289 = vadd.f32 %v48, %v245
  %v290 = vadd.f32 %v49, %v248
  %v291 = vadd.f32 %v50, %v253
  %v292 = vadd.f32 %v51, %v256
  %v293 = vadd.f32 %v52, %v261
  %v294 = vadd.f32 %v53, %v264
  %v295 = vadd.f32 %v54, %v269
  %v296 = vadd.f32 %v55, %v272
  %v297 = vadd.f32 %v56, %v277
  %v298 = vadd.f32 %v57, %v280
  %vm299 = vcmask 64512
  %300 = vst.msk [vmem:[#allocation2] sm:$0xff] %vm299, %v283
  %301 = vst.msk [vmem:[#allocation2 + $0x8] sm:$0xff] %vm299, %v284
  %302 = vst.msk [vmem:[#allocation2 + $0x10] sm:$0xff] %vm299, %v285
  %303 = vst.msk [vmem:[#allocation2 + $0x18] sm:$0xff] %vm299, %v286
  %304 = vst.msk [vmem:[#allocation2 + $0x20] sm:$0xff] %vm299, %v287
  %305 = vst.msk [vmem:[#allocation2 + $0x28] sm:$0xff] %vm299, %v288
  %306 = vst.msk [vmem:[#allocation2 + $0x30] sm:$0xff] %vm299, %v289
  %307 = vst.msk [vmem:[#allocation2 + $0x38] sm:$0xff] %vm299, %v290
  %308 = vst.msk [vmem:[#allocation2 + $0x40] sm:$0xff] %vm299, %v291
  %309 = vst.msk [vmem:[#allocation2 + $0x48] sm:$0xff] %vm299, %v292
  %310 = vst.msk [vmem:[#allocation2 + $0x50] sm:$0xff] %vm299, %v293
  %311 = vst.msk [vmem:[#allocation2 + $0x58] sm:$0xff] %vm299, %v294
  %312 = vst.msk [vmem:[#allocation2 + $0x60] sm:$0xff] %vm299, %v295
  %313 = vst.msk [vmem:[#allocation2 + $0x68] sm:$0xff] %vm299, %v296
  %314 = vst.msk [vmem:[#allocation2 + $0x70] sm:$0xff] %vm299, %v297
  %315 = vst.msk [vmem:[#allocation2 + $0x78] sm:$0xff] %vm299, %v298
  // Predicated region
  $region26: #{gnn_forward.3} parent=0 // pred_check
    %p316 = pneg %p21
  $region27: #{gnn_forward.3} parent=0 // pred_check_branch
    %318 = sbr.rel (%p316) target = $region29
  $region28: #{gnn_forward.3} parent=0 // pred_region
    %v319 = vld [vmem:[#allocation2] sm:$0xff]
    %v320 = vld [vmem:[#allocation2 + $0x8] sm:$0xff]
    %v321 = vld [vmem:[#allocation2 + $0x10] sm:$0xff]
    %v322 = vld [vmem:[#allocation2 + $0x18] sm:$0xff]
    %v323 = vld [vmem:[#allocation2 + $0x20] sm:$0xff]
    %v324 = vld [vmem:[#allocation2 + $0x28] sm:$0xff]
    %v325 = vld [vmem:[#allocation2 + $0x30] sm:$0xff]
    %v326 = vld [vmem:[#allocation2 + $0x38] sm:$0xff]
    %v327 = vld [vmem:[#allocation2 + $0x40] sm:$0xff]
    %v328 = vld [vmem:[#allocation2 + $0x48] sm:$0xff]
    %v329 = vld [vmem:[#allocation2 + $0x50] sm:$0xff]
    %v330 = vld [vmem:[#allocation2 + $0x58] sm:$0xff]
    %v331 = vld [vmem:[#allocation2 + $0x60] sm:$0xff]
    %v332 = vld [vmem:[#allocation2 + $0x68] sm:$0xff]
    %v333 = vld [vmem:[#allocation2 + $0x70] sm:$0xff]
    %v334 = vld [vmem:[#allocation2 + $0x78] sm:$0xff]
    %v335 = vld [vmem:[%s2] sm:$0x1]
    %337 = vset.pattern.permute.xlu0 0
    %338 = vperm.xlu0 %337, %v319
    %v339 = vpop.permute.xlu0 %338
    %342 = vset.pattern.permute.xlu0 0
    %343 = vperm.xlu0 %342, %v320
    %v344 = vpop.permute.xlu0 %343
    %347 = vset.pattern.permute.xlu0 0
    %348 = vperm.xlu0 %347, %v321
    %v349 = vpop.permute.xlu0 %348
    %352 = vset.pattern.permute.xlu0 0
    %353 = vperm.xlu0 %352, %v322
    %v354 = vpop.permute.xlu0 %353
    %357 = vset.pattern.permute.xlu0 0
    %358 = vperm.xlu0 %357, %v323
    %v359 = vpop.permute.xlu0 %358
    %362 = vset.pattern.permute.xlu0 0
    %363 = vperm.xlu0 %362, %v324
    %v364 = vpop.permute.xlu0 %363
    %367 = vset.pattern.permute.xlu0 0
    %368 = vperm.xlu0 %367, %v325
    %v369 = vpop.permute.xlu0 %368
    %372 = vset.pattern.permute.xlu0 0
    %373 = vperm.xlu0 %372, %v326
    %v374 = vpop.permute.xlu0 %373
    %377 = vset.pattern.permute.xlu0 0
    %378 = vperm.xlu0 %377, %v327
    %v379 = vpop.permute.xlu0 %378
    %382 = vset.pattern.permute.xlu0 0
    %383 = vperm.xlu0 %382, %v328
    %v384 = vpop.permute.xlu0 %383
    %387 = vset.pattern.permute.xlu0 0
    %388 = vperm.xlu0 %387, %v329
    %v389 = vpop.permute.xlu0 %388
    %392 = vset.pattern.permute.xlu0 0
    %393 = vperm.xlu0 %392, %v330
    %v394 = vpop.permute.xlu0 %393
    %397 = vset.pattern.permute.xlu0 0
    %398 = vperm.xlu0 %397, %v331
    %v399 = vpop.permute.xlu0 %398
    %402 = vset.pattern.permute.xlu0 0
    %403 = vperm.xlu0 %402, %v332
    %v404 = vpop.permute.xlu0 %403
    %407 = vset.pattern.permute.xlu0 0
    %408 = vperm.xlu0 %407, %v333
    %v409 = vpop.permute.xlu0 %408
    %412 = vset.pattern.permute.xlu0 0
    %413 = vperm.xlu0 %412, %v334
    %v414 = vpop.permute.xlu0 %413
    %v417 = vlaneseq
    %v418 = vshrl.u32 %v417, 7
    %v419 = vsub.s32 0, %v418
    %v420 = vrot.slane %v335, %v419
    %v422 = vmul.f32 %v339, %v420
    %v423 = vmul.f32 %v344, %v420
    %v424 = vmul.f32 %v349, %v420
    %v425 = vmul.f32 %v354, %v420
    %v426 = vmul.f32 %v359, %v420
    %v427 = vmul.f32 %v364, %v420
    %v428 = vmul.f32 %v369, %v420
    %v429 = vmul.f32 %v374, %v420
    %v430 = vmul.f32 %v379, %v420
    %v431 = vmul.f32 %v384, %v420
    %v432 = vmul.f32 %v389, %v420
    %v433 = vmul.f32 %v394, %v420
    %v434 = vmul.f32 %v399, %v420
    %v435 = vmul.f32 %v404, %v420
    %v436 = vmul.f32 %v409, %v420
    %v437 = vmul.f32 %v414, %v420
    %v438 = vld [vmem:[%s3] sm:$0x1]
    %v440 = vlaneseq
    %v441 = vshrl.u32 %v440, 7
    %v442 = vsub.s32 0, %v441
    %v443 = vrot.slane %v438, %v442
    %v445 = vadd.f32 %v422, %v443
    %v446 = vadd.f32 %v423, %v443
    %v447 = vadd.f32 %v424, %v443
    %v448 = vadd.f32 %v425, %v443
    %v449 = vadd.f32 %v426, %v443
    %v450 = vadd.f32 %v427, %v443
    %v451 = vadd.f32 %v428, %v443
    %v452 = vadd.f32 %v429, %v443
    %v453 = vadd.f32 %v430, %v443
    %v454 = vadd.f32 %v431, %v443
    %v455 = vadd.f32 %v432, %v443
    %v456 = vadd.f32 %v433, %v443
    %v457 = vadd.f32 %v434, %v443
    %v458 = vadd.f32 %v435, %v443
    %v459 = vadd.f32 %v436, %v443
    %v460 = vadd.f32 %v437, %v443
    %v461 = vmax.f32 %v445, 0.0
    %v462 = vmax.f32 %v446, 0.0
    %v463 = vmax.f32 %v447, 0.0
    %v464 = vmax.f32 %v448, 0.0
    %v465 = vmax.f32 %v449, 0.0
    %v466 = vmax.f32 %v450, 0.0
    %v467 = vmax.f32 %v451, 0.0
    %v468 = vmax.f32 %v452, 0.0
    %v469 = vmax.f32 %v453, 0.0
    %v470 = vmax.f32 %v454, 0.0
    %v471 = vmax.f32 %v455, 0.0
    %v472 = vmax.f32 %v456, 0.0
    %v473 = vmax.f32 %v457, 0.0
    %v474 = vmax.f32 %v458, 0.0
    %v475 = vmax.f32 %v459, 0.0
    %v476 = vmax.f32 %v460, 0.0
    %v477 = vpack.c.bf16 %v462, %v461
    %v478 = vpack.c.bf16 %v464, %v463
    %v479 = vpack.c.bf16 %v466, %v465
    %v480 = vpack.c.bf16 %v468, %v467
    %v481 = vpack.c.bf16 %v470, %v469
    %v482 = vpack.c.bf16 %v472, %v471
    %v483 = vpack.c.bf16 %v474, %v473
    %v484 = vpack.c.bf16 %v476, %v475
    %v485 = vld [vmem:[%s4] sm:$0xf]
    %v486 = vld [vmem:[%s4 + $0x4] sm:$0xf]
    %v487 = vld [vmem:[%s4 + $0x8] sm:$0xf]
    %v488 = vld [vmem:[%s4 + $0xc] sm:$0xf]
    %v489 = vld [vmem:[%s4 + $0x10] sm:$0xf]
    %v490 = vld [vmem:[%s4 + $0x14] sm:$0xf]
    %v491 = vld [vmem:[%s4 + $0x18] sm:$0xf]
    %v492 = vld [vmem:[%s4 + $0x1c] sm:$0xf]
    %v493 = vld [vmem:[%s4 + $0x20] sm:$0xf]
    %v494 = vld [vmem:[%s4 + $0x24] sm:$0xf]
    %v495 = vld [vmem:[%s4 + $0x28] sm:$0xf]
    %v496 = vld [vmem:[%s4 + $0x2c] sm:$0xf]
    %v497 = vld [vmem:[%s4 + $0x30] sm:$0xf]
    %v498 = vld [vmem:[%s4 + $0x34] sm:$0xf]
    %v499 = vld [vmem:[%s4 + $0x38] sm:$0xf]
    %v500 = vld [vmem:[%s4 + $0x3c] sm:$0xf]
    %v517 = vunpack.c.l.b16 %v485
    %v518 = vunpack.c.l.b16 %v486
    %v519 = vunpack.c.l.b16 %v487
    %v520 = vunpack.c.l.b16 %v488
    %v521 = vunpack.c.l.b16 %v489
    %v522 = vunpack.c.l.b16 %v490
    %v523 = vunpack.c.l.b16 %v491
    %v524 = vunpack.c.l.b16 %v492
    %v525 = vunpack.c.l.b16 %v493
    %v526 = vunpack.c.l.b16 %v494
    %v527 = vunpack.c.l.b16 %v495
    %v528 = vunpack.c.l.b16 %v496
    %v529 = vunpack.c.l.b16 %v497
    %v530 = vunpack.c.l.b16 %v498
    %v531 = vunpack.c.l.b16 %v499
    %v532 = vunpack.c.l.b16 %v500
    %v533 = vpack.c.b16 %v518, %v517
    %v534 = vpack.c.b16 %v520, %v519
    %v535 = vpack.c.b16 %v522, %v521
    %v536 = vpack.c.b16 %v524, %v523
    %v537 = vpack.c.b16 %v526, %v525
    %v538 = vpack.c.b16 %v528, %v527
    %v539 = vpack.c.b16 %v530, %v529
    %v540 = vpack.c.b16 %v532, %v531
    %549 = vmatprep.subr.bf16.mxu0 0
    %550 = vmatpush1.bf16.msra.mxu0 %v533
    %551 = vmatprep.subr.bf16.mxu0 0
    %552 = vmatpush1.bf16.msra.mxu0 %v534
    %553 = vmatprep.subr.bf16.mxu0 0
    %554 = vmatpush1.bf16.msra.mxu0 %v535
    %555 = vmatprep.subr.bf16.mxu0 0
    %556 = vmatpush1.bf16.msra.mxu0 %v536
    %557 = vmatprep.subr.bf16.mxu0 0
    %558 = vmatpush1.bf16.msra.mxu0 %v537
    %559 = vmatprep.subr.bf16.mxu0 0
    %560 = vmatpush1.bf16.msra.mxu0 %v538
    %561 = vmatprep.subr.bf16.mxu0 0
    %562 = vmatpush1.bf16.msra.mxu0 %v539
    %563 = vmatprep.subr.bf16.mxu0 0
    %564 = vmatpush1.bf16.msra.mxu0 %v540
    %565 = vmatprep.subr.bf16.mxu0 0
    %566 = vmatpush1.bf16.msra.mxu0 0
    %567 = vmatprep.subr.bf16.mxu0 0
    %568 = vmatpush1.bf16.msra.mxu0 0
    %569 = vmatprep.subr.bf16.mxu0 0
    %570 = vmatpush1.bf16.msra.mxu0 0
    %571 = vmatprep.subr.bf16.mxu0 0
    %572 = vmatpush1.bf16.msra.mxu0 0
    %573 = vmatprep.subr.bf16.mxu0 0
    %574 = vmatpush1.bf16.msra.mxu0 0
    %575 = vmatprep.subr.bf16.mxu0 0
    %576 = vmatpush1.bf16.msra.mxu0 0
    %577 = vmatprep.subr.bf16.mxu0 0
    %578 = vmatpush1.bf16.msra.mxu0 0
    %579 = vmatprep.subr.bf16.mxu0 0
    %580 = vmatpush1.bf16.msra.mxu0 0
    %581 = vmatprep.mubr.bf16.mxu0 0
    %582 = vmatmul.mubr.bf16.gmra.mrb[0].mxu0 %v477
    %v583 = vpop.f32.mrb[0].mxu0
    %v584 = vadd.f32 0.0, %v583
    %v585 = vpop.f32.mrb[0].mxu0
    %v586 = vpop.f32.mrb[0].mxu0
    %v587 = vadd.f32 0.0, %v586
    %v588 = vpop.f32.mrb[0].mxu0
    %589 = vmatprep.mubr.bf16.mxu0 0
    %590 = vmatmul.mubr.bf16.gmra.mrb[0].mxu0 %v478
    %v591 = vpop.f32.mrb[0].mxu0
    %v592 = vadd.f32 0.0, %v591
    %v593 = vpop.f32.mrb[0].mxu0
    %v594 = vpop.f32.mrb[0].mxu0
    %v595 = vadd.f32 0.0, %v594
    %v596 = vpop.f32.mrb[0].mxu0
    %597 = vmatprep.mubr.bf16.mxu0 0
    %598 = vmatmul.mubr.bf16.gmra.mrb[0].mxu0 %v479
    %v599 = vpop.f32.mrb[0].mxu0
    %v600 = vadd.f32 0.0, %v599
    %v601 = vpop.f32.mrb[0].mxu0
    %v602 = vpop.f32.mrb[0].mxu0
    %v603 = vadd.f32 0.0, %v602
    %v604 = vpop.f32.mrb[0].mxu0
    %605 = vmatprep.mubr.bf16.mxu0 0
    %606 = vmatmul.mubr.bf16.gmra.mrb[0].mxu0 %v480
    %v607 = vpop.f32.mrb[0].mxu0
    %v608 = vadd.f32 0.0, %v607
    %v609 = vpop.f32.mrb[0].mxu0
    %v610 = vpop.f32.mrb[0].mxu0
    %v611 = vadd.f32 0.0, %v610
    %v612 = vpop.f32.mrb[0].mxu0
    %613 = vmatprep.mubr.bf16.mxu0 0
    %614 = vmatmul.mubr.bf16.gmra.mrb[0].mxu0 %v481
    %v615 = vpop.f32.mrb[0].mxu0
    %v616 = vadd.f32 0.0, %v615
    %v617 = vpop.f32.mrb[0].mxu0
    %v618 = vpop.f32.mrb[0].mxu0
    %v619 = vadd.f32 0.0, %v618
    %v620 = vpop.f32.mrb[0].mxu0
    %621 = vmatprep.mubr.bf16.mxu0 0
    %622 = vmatmul.mubr.bf16.gmra.mrb[0].mxu0 %v482
    %v623 = vpop.f32.mrb[0].mxu0
    %v624 = vadd.f32 0.0, %v623
    %v625 = vpop.f32.mrb[0].mxu0
    %v626 = vpop.f32.mrb[0].mxu0
    %v627 = vadd.f32 0.0, %v626
    %v628 = vpop.f32.mrb[0].mxu0
    %629 = vmatprep.mubr.bf16.mxu0 0
    %630 = vmatmul.mubr.bf16.gmra.mrb[0].mxu0 %v483
    %v631 = vpop.f32.mrb[0].mxu0
    %v632 = vadd.f32 0.0, %v631
    %v633 = vpop.f32.mrb[0].mxu0
    %v634 = vpop.f32.mrb[0].mxu0
    %v635 = vadd.f32 0.0, %v634
    %v636 = vpop.f32.mrb[0].mxu0
    %637 = vmatprep.mubr.bf16.mxu0 0
    %638 = vmatmul.mubr.bf16.gmra.mrb[0].mxu0 %v484
    %v639 = vpop.f32.mrb[0].mxu0
    %v640 = vadd.f32 0.0, %v639
    %v641 = vpop.f32.mrb[0].mxu0
    %v642 = vpop.f32.mrb[0].mxu0
    %v643 = vadd.f32 0.0, %v642
    %v644 = vpop.f32.mrb[0].mxu0
    %645 = vdwg.mxu0
    %v646 = vpack.c.bf16 %v587, %v584
    %v647 = vpack.c.bf16 %v595, %v592
    %v648 = vpack.c.bf16 %v603, %v600
    %v649 = vpack.c.bf16 %v611, %v608
    %v650 = vpack.c.bf16 %v619, %v616
    %v651 = vpack.c.bf16 %v627, %v624
    %v652 = vpack.c.bf16 %v635, %v632
    %v653 = vpack.c.bf16 %v643, %v640
    %v662 = vunpack.c.l.b16 %v646
    %v663 = vunpack.c.h.b16 %v646
    %v664 = vunpack.c.l.b16 %v647
    %v665 = vunpack.c.h.b16 %v647
    %v666 = vunpack.c.l.b16 %v648
    %v667 = vunpack.c.h.b16 %v648
    %v668 = vunpack.c.l.b16 %v649
    %v669 = vunpack.c.h.b16 %v649
    %v670 = vunpack.c.l.b16 %v650
    %v671 = vunpack.c.h.b16 %v650
    %v672 = vunpack.c.l.b16 %v651
    %v673 = vunpack.c.h.b16 %v651
    %v674 = vunpack.c.l.b16 %v652
    %v675 = vunpack.c.h.b16 %v652
    %v676 = vunpack.c.l.b16 %v653
    %v677 = vunpack.c.h.b16 %v653
    %v678 = vpack.c.b16 %v662, %v662
    %v679 = vpack.c.b16 %v663, %v663
    %v680 = vpack.c.b16 %v664, %v664
    %v681 = vpack.c.b16 %v665, %v665
    %v682 = vpack.c.b16 %v666, %v666
    %v683 = vpack.c.b16 %v667, %v667
    %v684 = vpack.c.b16 %v668, %v668
    %v685 = vpack.c.b16 %v669, %v669
    %v686 = vpack.c.b16 %v670, %v670
    %v687 = vpack.c.b16 %v671, %v671
    %v688 = vpack.c.b16 %v672, %v672
    %v689 = vpack.c.b16 %v673, %v673
    %v690 = vpack.c.b16 %v674, %v674
    %v691 = vpack.c.b16 %v675, %v675
    %v692 = vpack.c.b16 %v676, %v676
    %v693 = vpack.c.b16 %v677, %v677
    %710 = vst [vmem:[%s5] sm:$0xf] %v678
    %711 = vst [vmem:[%s5 + $0x4] sm:$0xf] %v679
    %712 = vst [vmem:[%s5 + $0x8] sm:$0xf] %v680
    %713 = vst [vmem:[%s5 + $0xc] sm:$0xf] %v681
    %714 = vst [vmem:[%s5 + $0x10] sm:$0xf] %v682
    %715 = vst [vmem:[%s5 + $0x14] sm:$0xf] %v683
    %716 = vst [vmem:[%s5 + $0x18] sm:$0xf] %v684
    %717 = vst [vmem:[%s5 + $0x1c] sm:$0xf] %v685
    %718 = vst [vmem:[%s5 + $0x20] sm:$0xf] %v686
    %719 = vst [vmem:[%s5 + $0x24] sm:$0xf] %v687
    %720 = vst [vmem:[%s5 + $0x28] sm:$0xf] %v688
    %721 = vst [vmem:[%s5 + $0x2c] sm:$0xf] %v689
    %722 = vst [vmem:[%s5 + $0x30] sm:$0xf] %v690
    %723 = vst [vmem:[%s5 + $0x34] sm:$0xf] %v691
    %724 = vst [vmem:[%s5 + $0x38] sm:$0xf] %v692
    %725 = vst [vmem:[%s5 + $0x3c] sm:$0xf] %v693
  $region29: #{gnn_forward.3} parent=0 // pred_fallthru
    _
  // Predicated region
  $region30: #{gnn_forward.3} parent=0 // pred_check
    _
  $region31: #{gnn_forward.3} parent=0 // pred_check_branch
    %727 = sbr.rel (0) target = $region33
  $region32: #{gnn_forward.3} parent=0 // pred_region
    _
  $region33: #{gnn_forward.3} parent=0 // pred_fallthru
    _
  // Predicated region
  $region34: #{gnn_forward.3} parent=0 // pred_check
    _
  $region35: #{gnn_forward.3} parent=0 // pred_check_branch
    %729 = sbr.rel (0) target = $region37
  $region36: #{gnn_forward.3} parent=0 // pred_region
    _
  $region37: #{gnn_forward.3} parent=0 // pred_fallthru
    _

</llo_original>
